<compile_context>
chip_gen: v7x
topology: tpu7x:2x2x1
jax: 0.10.0
libtpu: 0.0.40
codegen_flags: <defaults>
</compile_context>

<pallas_src>
import jax
import jax.numpy as jnp
from jax.experimental import pallas as pl
from jax.experimental.pallas import tpu as pltpu


def attention_kernel(x_ref,
                     wx_ref, ws_ref, shift1_ref,
                     w2_ref, shift2_ref,
                     se1a_ref, se1b_ref, se2a_ref, se2b_ref,
                     gsum_ref, pmean_ref, bexp_ref,
                     o_ref):
    f32 = jnp.float32
    bf16 = jnp.bfloat16

    x = x_ref[...]                                   # (C, L) bf16, L = bt*HW (batch on lanes)
    pmean = pmean_ref[...]                           # (L, bt) bf16: per-batch spatial-mean matrix
    bexp = bexp_ref[...]                             # (bt, L) bf16: per-batch broadcast matrix

    # torch.split(x, C//4, 1) summed — one tiny constant matmul, no sublane slicing.
    spx = jnp.dot(gsum_ref[...], x, preferred_element_type=f32)          # (C_in, L) f32

    # --- SE1 (channel=C_in, reduction=8), batched over all bt batches in the block.
    m1 = jnp.dot(spx.astype(bf16), pmean, preferred_element_type=f32)    # (C_in, bt)
    h1 = jnp.maximum(jnp.dot(se1a_ref[...], m1, preferred_element_type=f32), 0.0)
    y1 = jax.nn.sigmoid(jnp.dot(se1b_ref[...], h1, preferred_element_type=f32))   # (C_in, bt)
    y1e = jnp.dot(y1.astype(bf16), bexp, preferred_element_type=f32)     # (C_in, L)
    spx_scaled = (spx * y1e).astype(bf16)                                # (C_in, L) bf16

    # --- channel_back conv1 (skip graph + concat + BN1 scale folded in wx/ws) + shift, ReLU.
    t = (jnp.dot(wx_ref[...], x, preferred_element_type=f32)
         + jnp.dot(ws_ref[...], spx_scaled, preferred_element_type=f32)
         + shift1_ref[...])                                              # (C, L) f32
    t = jnp.maximum(t, 0.0)

    # --- channel_back conv2 (BN2 scale folded) + shift, residual.
    att = (jnp.dot(w2_ref[...], t.astype(bf16), preferred_element_type=f32)
           + shift2_ref[...]
           + x.astype(f32))                                              # (C, L) f32

    # --- SE2 (channel=C, reduction=8), batched.
    m2 = jnp.dot(att.astype(bf16), pmean, preferred_element_type=f32)    # (C, bt)
    h2 = jnp.maximum(jnp.dot(se2a_ref[...], m2, preferred_element_type=f32), 0.0)
    z = jax.nn.sigmoid(jnp.dot(se2b_ref[...], h2, preferred_element_type=f32))    # (C, bt)
    ze = jnp.dot(z.astype(bf16), bexp, preferred_element_type=f32)       # (C, L)

    o_ref[...] = (att * ze).astype(o_ref.dtype)


def fold_params(p, eps=1e-5):
    """Host-side algebraic folding: skip graph + concat + eval-BN scales into weights."""
    C = p["cb_w2"].shape[0]
    C_in = C // 4

    w1 = p["cb_w1"]                                    # (C, 5*C_in)
    blk = [w1[:, i * C_in:(i + 1) * C_in] for i in range(5)]
    # s1..s4 as fixed linear combinations of spx0..spx3 (all ops = skip_connect):
    #   s1 = x0; s2 = x0+x1; s3 = 2x0+x1+x2; s4 = 4x0+2x1+x2+x3
    M = ((1, 0, 0, 0),
         (1, 1, 0, 0),
         (2, 1, 1, 0),
         (4, 2, 1, 1))
    wx = jnp.concatenate(
        [sum(float(M[i][j]) * blk[i] for i in range(4)) for j in range(4)],
        axis=1)                                        # (C, C)
    ws = blk[4]                                        # (C, C_in)

    s1 = p["bn1_gamma"] / jnp.sqrt(p["bn1_var"] + eps)
    b1 = p["bn1_beta"] - p["bn1_mean"] * s1
    s2 = p["bn2_gamma"] / jnp.sqrt(p["bn2_var"] + eps)
    b2 = p["bn2_beta"] - p["bn2_mean"] * s2

    return {
        "wx": (s1[:, None] * wx).astype(jnp.bfloat16),
        "ws": (s1[:, None] * ws).astype(jnp.bfloat16),
        "shift1": b1[:, None].astype(jnp.float32),
        "w2": (s2[:, None] * p["cb_w2"]).astype(jnp.bfloat16),
        "shift2": b2[:, None].astype(jnp.float32),
        "se1a": p["se_w1"].astype(jnp.float32),
        "se1b": p["se_w2"].astype(jnp.float32),
        "se2a": p["se2_w1"].astype(jnp.float32),
        "se2b": p["se2_w2"].astype(jnp.float32),
    }


def attention_forward(x_nchw, fp, *, batch_tile=None):
    B, C, H, W = x_nchw.shape
    HW = H * W
    C_in = C // 4

    # Batch tile: maximize the block (the dominant wall-clock lever), bounded by a
    # VMEM budget (bt <= 64 at these shapes keeps everything well under 48 MiB).
    # Single-TC chips (v5e/v6e) end up with one big step; when tiling is needed,
    # prefer an even step count so v7x's 2 TensorCores split the "parallel" axis.
    per_b = C * HW * 2                                   # bf16 bytes of one batch per block
    if batch_tile is None:
        bt = max(1, min(B, max(1, (2 << 20) // per_b), 64))
        while B % bt:
            bt -= 1
        steps = B // bt
        if steps > 1 and steps % 2:                      # avoid an idle v7x core on the last step
            for cand in range(bt - 1, 0, -1):
                if B % cand == 0 and (B // cand) % 2 == 0:
                    bt = cand
                    break
    else:
        bt = batch_tile
        assert B % bt == 0
    grid = (B // bt,)
    L = bt * HW
    assert L % 128 == 0 or grid == (1,), "lane block must be 128-aligned when tiled"

    # Wrapper-side layout plumbing: pack batch into the lane axis so every stage is
    # one wide, lane-dense (C|C_in, C) @ (C|C_in, bt*HW) MXU matmul.
    x_lanes = jnp.transpose(x_nchw.reshape(B, C, HW).astype(jnp.bfloat16),
                            (1, 0, 2)).reshape(C, B * HW)

    # Constant helper matrices (constant index_map -> fetched once, never re-DMA'd).
    seg = jnp.arange(L) // HW                                              # (L,)
    onehot = (seg[:, None] == jnp.arange(bt)[None, :]).astype(jnp.float32)
    pmean = (onehot / HW).astype(jnp.bfloat16)                             # (L, bt)
    bexp = onehot.T.astype(jnp.bfloat16)                                   # (bt, L)
    gsum = (jnp.arange(C)[None, :] % C_in
            == jnp.arange(C_in)[:, None]).astype(jnp.bfloat16)             # (C_in, C)

    weight_order = ("wx", "ws", "shift1", "w2", "shift2",
                    "se1a", "se1b", "se2a", "se2b")
    weights = [fp[k] for k in weight_order] + [gsum, pmean, bexp]
    w_bytes = sum(int(w.size) * w.dtype.itemsize for w in weights)

    def full_spec(a):
        return pl.BlockSpec(a.shape, lambda b, n=a.ndim: (0,) * n)

    # NOTE: if a trace ever shows exposed DMA on the x block, add
    # pipeline_mode=pl.Buffered(3) to this spec (costs one extra block of VMEM).
    in_specs = ([pl.BlockSpec((C, L), lambda b: (0, b))]
                + [full_spec(w) for w in weights])
    out_spec = pl.BlockSpec((C, L), lambda b: (0, b))

    cost = pl.CostEstimate(
        flops=int(2 * B * HW * (2 * C * C + 2 * C * C_in)       # main matmuls
                  + 4 * B * HW * bt * (C + C_in)),              # mean/broadcast matmuls
        transcendentals=int(B * (C + C_in)),
        bytes_accessed=int(2 * B * C * HW * 2 + w_bytes))

    # VMEM: double-buffered bf16 I/O blocks + f32 temporaries + constants.
    # Capped at 48 MiB so the request always fits v7x's 64 MiB physical VMEM
    # (v5e/v6e have 128 MiB, so the cap is safe everywhere).
    vmem_est = (4 * C * L * 2            # in + out blocks, double-buffered, bf16
                + 6 * C * L * 4          # f32 temporaries (spx, t, att, gate expands, ...)
                + 2 * w_bytes            # weights / helper matrices
                + (2 << 20))
    vmem_limit = int(min(48 * 2 ** 20, max(32 * 2 ** 20, int(vmem_est * 1.5))))

    out = pl.pallas_call(
        attention_kernel,
        out_shape=jax.ShapeDtypeStruct((C, B * HW), jnp.bfloat16),
        grid=grid,
        in_specs=in_specs,
        out_specs=out_spec,
        compiler_params=pltpu.CompilerParams(
            dimension_semantics=("parallel",),
            vmem_limit_bytes=vmem_limit),
        cost_estimate=cost,
    )(x_lanes, *weights)

    return jnp.transpose(out.reshape(C, B, HW), (1, 0, 2)).reshape(B, C, H, W)


def reference_forward(x, p, eps=1e-5):
    """Pure-JAX f32 reference mirroring the PyTorch forward (skip_connect ops, eval BN)."""
    spx = jnp.split(x, 4, axis=1)
    spx_sum = spx[0] + spx[1] + spx[2] + spx[3]

    def se(v, w1, w2):
        y = jnp.mean(v, axis=(2, 3))
        y = jnp.maximum(y @ w1.T, 0.0)
        y = jax.nn.sigmoid(y @ w2.T)
        return v * y[:, :, None, None]

    def bn(v, g, b, m, var):
        inv = g / jnp.sqrt(var + eps)
        return (v - m[None, :, None, None]) * inv[None, :, None, None] \
            + b[None, :, None, None]

    spx_sum = se(spx_sum, p["se_w1"], p["se_w2"])

    s1 = spx[0]
    s2 = spx[1] + s1
    s3 = spx[2] + s1 + s2
    s4 = spx[3] + s1 + s2 + s3
    nc = jnp.concatenate([s1, s2, s3, s4, spx_sum], axis=1)

    t = jnp.einsum("oc,bchw->bohw", p["cb_w1"], nc)
    t = bn(t, p["bn1_gamma"], p["bn1_beta"], p["bn1_mean"], p["bn1_var"])
    t = jnp.maximum(t, 0.0)
    t = jnp.einsum("oc,bchw->bohw", p["cb_w2"], t)
    t = bn(t, p["bn2_gamma"], p["bn2_beta"], p["bn2_mean"], p["bn2_var"])

    att = t + x
    return se(att, p["se2_w1"], p["se2_w2"])


def make_params(C, key):
    C_in = C // 4
    ks = jax.random.split(key, 14)

    def kaiming_u(k, shape, fan_in):
        b = 1.0 / jnp.sqrt(jnp.float32(fan_in))
        return jax.random.uniform(k, shape, jnp.float32, -b, b)

    def bn_stats(kg, kb, km, kv, c):
        return (jax.random.uniform(kg, (c,), jnp.float32, 0.5, 1.5),
                0.1 * jax.random.normal(kb, (c,), jnp.float32),
                0.1 * jax.random.normal(km, (c,), jnp.float32),
                jax.random.uniform(kv, (c,), jnp.float32, 0.5, 1.5))

    g1, b1, m1, v1 = bn_stats(ks[6], ks[7], ks[8], ks[9], C)
    g2, b2, m2, v2 = bn_stats(ks[10], ks[11], ks[12], ks[13], C)

    return {
        # SE(channel=C_in, reduction=8): Linear weights are (out, in), no bias
        "se_w1": kaiming_u(ks[0], (C_in // 8, C_in), C_in),
        "se_w2": kaiming_u(ks[1], (C_in, C_in // 8), C_in // 8),
        # channel_back 1x1 convs (no bias): (Cout, Cin)
        "cb_w1": kaiming_u(ks[2], (C, 5 * C_in), 5 * C_in),
        "cb_w2": kaiming_u(ks[3], (C, C), C),
        # SE2(channel=C, reduction=8)
        "se2_w1": kaiming_u(ks[4], (C // 8, C), C),
        "se2_w2": kaiming_u(ks[5], (C, C // 8), C // 8),
        "bn1_gamma": g1, "bn1_beta": b1, "bn1_mean": m1, "bn1_var": v1,
        "bn2_gamma": g2, "bn2_beta": b2, "bn2_mean": m2, "bn2_var": v2,
    }


if __name__ == "__main__":
    # C must be divisible by 4 and C//4 divisible by the SE reduction (8) => C = 32.
    B, C, H, W = 2, 32, 16, 16

    key = jax.random.PRNGKey(0)
    kx, kp = jax.random.split(key)
    x = jax.random.normal(kx, (B, C, H, W), jnp.float32)
    params = make_params(C, kp)
    folded = fold_params(params)

    out = jax.block_until_ready(attention_forward(x, folded))
    assert out.shape == (B, C, H, W)

    # f32 reference (module-mirroring) on the same bf16-rounded input; kernel keeps
    # f32 accumulation, so only bf16 weight/intermediate rounding differs.
    xq = x.astype(jnp.bfloat16).astype(jnp.float32)
    ref = jax.block_until_ready(reference_forward(xq, params))

    out_f = out.astype(jnp.float32)
    err = jnp.max(jnp.abs(out_f - ref))
    assert jnp.allclose(out_f, ref, atol=1e-1, rtol=5e-2), f"max abs err = {err}"

    # TODO(synk): BatchNorm is eval-mode only (folded running stats) and the genotype
    # is assumed all-skip_connect (global OPS/genotype not provided); other genotypes
    # or training-mode BN statistics are not reproduced.
    print("KERNEL_OK")
</pallas_src>

<mosaic_0001>
module attributes {stable_mosaic.version = 11 : i64} {
  func.func @attention_kernel(%arg0: i32, %arg1: memref<32x512xbf16, #tpu.memory_space<vmem>>, %arg2: memref<32x32xbf16, #tpu.memory_space<vmem>>, %arg3: memref<32x8xbf16, #tpu.memory_space<vmem>>, %arg4: memref<32x1xf32, #tpu.memory_space<vmem>>, %arg5: memref<32x32xbf16, #tpu.memory_space<vmem>>, %arg6: memref<32x1xf32, #tpu.memory_space<vmem>>, %arg7: memref<1x8xf32, #tpu.memory_space<vmem>>, %arg8: memref<8x1xf32, #tpu.memory_space<vmem>>, %arg9: memref<4x32xf32, #tpu.memory_space<vmem>>, %arg10: memref<32x4xf32, #tpu.memory_space<vmem>>, %arg11: memref<8x32xbf16, #tpu.memory_space<vmem>>, %arg12: memref<512x2xbf16, #tpu.memory_space<vmem>>, %arg13: memref<2x512xbf16, #tpu.memory_space<vmem>>, %arg14: memref<32x512xbf16, #tpu.memory_space<vmem>>) attributes {dimension_semantics = [#tpu.dimension_semantics<parallel>], iteration_bounds = array<i64: 1>, scalar_prefetch = 0 : i64, scratch_operands = 0 : i64, tpu.core_type = #tpu.core_type<tc>, window_params = [{transform_indices = @transform_0, window_bounds = array<i64: 32, 512>}, {pipeline_mode = #tpu.pipeline_mode<synchronous>, transform_indices = @transform_1, window_bounds = array<i64: 32, 32>}, {pipeline_mode = #tpu.pipeline_mode<synchronous>, transform_indices = @transform_2, window_bounds = array<i64: 32, 8>}, {pipeline_mode = #tpu.pipeline_mode<synchronous>, transform_indices = @transform_3, window_bounds = array<i64: 32, 1>}, {pipeline_mode = #tpu.pipeline_mode<synchronous>, transform_indices = @transform_4, window_bounds = array<i64: 32, 32>}, {pipeline_mode = #tpu.pipeline_mode<synchronous>, transform_indices = @transform_5, window_bounds = array<i64: 32, 1>}, {pipeline_mode = #tpu.pipeline_mode<synchronous>, transform_indices = @transform_6, window_bounds = array<i64: 1, 8>}, {pipeline_mode = #tpu.pipeline_mode<synchronous>, transform_indices = @transform_7, window_bounds = array<i64: 8, 1>}, {pipeline_mode = #tpu.pipeline_mode<synchronous>, transform_indices = @transform_8, window_bounds = array<i64: 4, 32>}, {pipeline_mode = #tpu.pipeline_mode<synchronous>, transform_indices = @transform_9, window_bounds = array<i64: 32, 4>}, {pipeline_mode = #tpu.pipeline_mode<synchronous>, transform_indices = @transform_10, window_bounds = array<i64: 8, 32>}, {pipeline_mode = #tpu.pipeline_mode<synchronous>, transform_indices = @transform_11, window_bounds = array<i64: 512, 2>}, {pipeline_mode = #tpu.pipeline_mode<synchronous>, transform_indices = @transform_12, window_bounds = array<i64: 2, 512>}, {transform_indices = @transform_13, window_bounds = array<i64: 32, 512>}]} {
    %c0 = arith.constant 0 : index
    %c0_0 = arith.constant 0 : index
    %0 = vector.load %arg1[%c0, %c0_0] : memref<32x512xbf16, #tpu.memory_space<vmem>>, vector<32x512xbf16>
    %c0_1 = arith.constant 0 : index
    %c0_2 = arith.constant 0 : index
    %1 = vector.load %arg12[%c0_1, %c0_2] : memref<512x2xbf16, #tpu.memory_space<vmem>>, vector<512x2xbf16>
    %c0_3 = arith.constant 0 : index
    %c0_4 = arith.constant 0 : index
    %2 = vector.load %arg13[%c0_3, %c0_4] : memref<2x512xbf16, #tpu.memory_space<vmem>>, vector<2x512xbf16>
    %c0_5 = arith.constant 0 : index
    %c0_6 = arith.constant 0 : index
    %3 = vector.load %arg11[%c0_5, %c0_6] : memref<8x32xbf16, #tpu.memory_space<vmem>>, vector<8x32xbf16>
    %cst = arith.constant dense<0.000000e+00> : vector<8x512xf32>
    %4 = tpu.matmul %3, %0, %cst {dimension_numbers = #tpu.dot_dimension_numbers<[1], [0], [0], [1], [0, 0, 1, 1], [], []>} : vector<8x32xbf16>, vector<32x512xbf16>, vector<8x512xf32> -> vector<8x512xf32>
    %5 = arith.truncf %4 : vector<8x512xf32> to vector<8x512xbf16>
    %cst_7 = arith.constant dense<0.000000e+00> : vector<8x2xf32>
    %6 = tpu.matmul %5, %1, %cst_7 {dimension_numbers = #tpu.dot_dimension_numbers<[1], [0], [0], [1], [0, 0, 1, 1], [], []>} : vector<8x512xbf16>, vector<512x2xbf16>, vector<8x2xf32> -> vector<8x2xf32>
    %c0_8 = arith.constant 0 : index
    %c0_9 = arith.constant 0 : index
    %7 = vector.load %arg7[%c0_8, %c0_9] : memref<1x8xf32, #tpu.memory_space<vmem>>, vector<1x8xf32>
    %cst_10 = arith.constant dense<0.000000e+00> : vector<1x2xf32>
    %8 = tpu.matmul %7, %6, %cst_10 {dimension_numbers = #tpu.dot_dimension_numbers<[1], [0], [0], [1], [0, 0, 1, 1], [], []>} : vector<1x8xf32>, vector<8x2xf32>, vector<1x2xf32> -> vector<1x2xf32>
    %cst_11 = arith.constant 0.000000e+00 : f32
    %9 = vector.broadcast %cst_11 : f32 to vector<1x2xf32>
    %10 = arith.maximumf %8, %9 : vector<1x2xf32>
    %c0_12 = arith.constant 0 : index
    %c0_13 = arith.constant 0 : index
    %11 = vector.load %arg8[%c0_12, %c0_13] : memref<8x1xf32, #tpu.memory_space<vmem>>, vector<8x1xf32>
    %cst_14 = arith.constant dense<0.000000e+00> : vector<8x2xf32>
    %12 = tpu.matmul %11, %10, %cst_14 {dimension_numbers = #tpu.dot_dimension_numbers<[1], [0], [0], [1], [0, 0, 1, 1], [], []>} : vector<8x1xf32>, vector<1x2xf32>, vector<8x2xf32> -> vector<8x2xf32>
    %13 = arith.negf %12 : vector<8x2xf32>
    %14 = math.exp %13 : vector<8x2xf32>
    %cst_15 = arith.constant 1.000000e+00 : f32
    %15 = vector.broadcast %cst_15 : f32 to vector<8x2xf32>
    %16 = arith.addf %15, %14 : vector<8x2xf32>
    %17 = arith.divf %15, %16 : vector<8x2xf32>
    %18 = arith.truncf %17 : vector<8x2xf32> to vector<8x2xbf16>
    %cst_16 = arith.constant dense<0.000000e+00> : vector<8x512xf32>
    %19 = tpu.matmul %18, %2, %cst_16 {dimension_numbers = #tpu.dot_dimension_numbers<[1], [0], [0], [1], [0, 0, 1, 1], [], []>} : vector<8x2xbf16>, vector<2x512xbf16>, vector<8x512xf32> -> vector<8x512xf32>
    %20 = arith.mulf %4, %19 : vector<8x512xf32>
    %21 = arith.truncf %20 : vector<8x512xf32> to vector<8x512xbf16>
    %c0_17 = arith.constant 0 : index
    %c0_18 = arith.constant 0 : index
    %22 = vector.load %arg2[%c0_17, %c0_18] : memref<32x32xbf16, #tpu.memory_space<vmem>>, vector<32x32xbf16>
    %cst_19 = arith.constant dense<0.000000e+00> : vector<32x512xf32>
    %23 = tpu.matmul %22, %0, %cst_19 {dimension_numbers = #tpu.dot_dimension_numbers<[1], [0], [0], [1], [0, 0, 1, 1], [], []>} : vector<32x32xbf16>, vector<32x512xbf16>, vector<32x512xf32> -> vector<32x512xf32>
    %c0_20 = arith.constant 0 : index
    %c0_21 = arith.constant 0 : index
    %24 = vector.load %arg3[%c0_20, %c0_21] : memref<32x8xbf16, #tpu.memory_space<vmem>>, vector<32x8xbf16>
    %cst_22 = arith.constant dense<0.000000e+00> : vector<32x512xf32>
    %25 = tpu.matmul %24, %21, %cst_22 {dimension_numbers = #tpu.dot_dimension_numbers<[1], [0], [0], [1], [0, 0, 1, 1], [], []>} : vector<32x8xbf16>, vector<8x512xbf16>, vector<32x512xf32> -> vector<32x512xf32>
    %26 = arith.addf %23, %25 : vector<32x512xf32>
    %c0_23 = arith.constant 0 : index
    %c0_24 = arith.constant 0 : index
    %27 = vector.load %arg4[%c0_23, %c0_24] : memref<32x1xf32, #tpu.memory_space<vmem>>, vector<32x1xf32>
    %28 = vector.broadcast %27 : vector<32x1xf32> to vector<32x512xf32>
    %29 = arith.addf %26, %28 : vector<32x512xf32>
    %cst_25 = arith.constant 0.000000e+00 : f32
    %30 = vector.broadcast %cst_25 : f32 to vector<32x512xf32>
    %31 = arith.maximumf %29, %30 : vector<32x512xf32>
    %c0_26 = arith.constant 0 : index
    %c0_27 = arith.constant 0 : index
    %32 = vector.load %arg5[%c0_26, %c0_27] : memref<32x32xbf16, #tpu.memory_space<vmem>>, vector<32x32xbf16>
    %33 = arith.truncf %31 : vector<32x512xf32> to vector<32x512xbf16>
    %cst_28 = arith.constant dense<0.000000e+00> : vector<32x512xf32>
    %34 = tpu.matmul %32, %33, %cst_28 {dimension_numbers = #tpu.dot_dimension_numbers<[1], [0], [0], [1], [0, 0, 1, 1], [], []>} : vector<32x32xbf16>, vector<32x512xbf16>, vector<32x512xf32> -> vector<32x512xf32>
    %c0_29 = arith.constant 0 : index
    %c0_30 = arith.constant 0 : index
    %35 = vector.load %arg6[%c0_29, %c0_30] : memref<32x1xf32, #tpu.memory_space<vmem>>, vector<32x1xf32>
    %36 = vector.broadcast %35 : vector<32x1xf32> to vector<32x512xf32>
    %37 = arith.addf %34, %36 : vector<32x512xf32>
    %38 = arith.extf %0 : vector<32x512xbf16> to vector<32x512xf32>
    %39 = arith.addf %37, %38 : vector<32x512xf32>
    %40 = arith.truncf %39 : vector<32x512xf32> to vector<32x512xbf16>
    %cst_31 = arith.constant dense<0.000000e+00> : vector<32x2xf32>
    %41 = tpu.matmul %40, %1, %cst_31 {dimension_numbers = #tpu.dot_dimension_numbers<[1], [0], [0], [1], [0, 0, 1, 1], [], []>} : vector<32x512xbf16>, vector<512x2xbf16>, vector<32x2xf32> -> vector<32x2xf32>
    %c0_32 = arith.constant 0 : index
    %c0_33 = arith.constant 0 : index
    %42 = vector.load %arg9[%c0_32, %c0_33] : memref<4x32xf32, #tpu.memory_space<vmem>>, vector<4x32xf32>
    %cst_34 = arith.constant dense<0.000000e+00> : vector<4x2xf32>
    %43 = tpu.matmul %42, %41, %cst_34 {dimension_numbers = #tpu.dot_dimension_numbers<[1], [0], [0], [1], [0, 0, 1, 1], [], []>} : vector<4x32xf32>, vector<32x2xf32>, vector<4x2xf32> -> vector<4x2xf32>
    %cst_35 = arith.constant 0.000000e+00 : f32
    %44 = vector.broadcast %cst_35 : f32 to vector<4x2xf32>
    %45 = arith.maximumf %43, %44 : vector<4x2xf32>
    %c0_36 = arith.constant 0 : index
    %c0_37 = arith.constant 0 : index
    %46 = vector.load %arg10[%c0_36, %c0_37] : memref<32x4xf32, #tpu.memory_space<vmem>>, vector<32x4xf32>
    %cst_38 = arith.constant dense<0.000000e+00> : vector<32x2xf32>
    %47 = tpu.matmul %46, %45, %cst_38 {dimension_numbers = #tpu.dot_dimension_numbers<[1], [0], [0], [1], [0, 0, 1, 1], [], []>} : vector<32x4xf32>, vector<4x2xf32>, vector<32x2xf32> -> vector<32x2xf32>
    %48 = arith.negf %47 : vector<32x2xf32>
    %49 = math.exp %48 : vector<32x2xf32>
    %cst_39 = arith.constant 1.000000e+00 : f32
    %50 = vector.broadcast %cst_39 : f32 to vector<32x2xf32>
    %51 = arith.addf %50, %49 : vector<32x2xf32>
    %52 = arith.divf %50, %51 : vector<32x2xf32>
    %53 = arith.truncf %52 : vector<32x2xf32> to vector<32x2xbf16>
    %cst_40 = arith.constant dense<0.000000e+00> : vector<32x512xf32>
    %54 = tpu.matmul %53, %2, %cst_40 {dimension_numbers = #tpu.dot_dimension_numbers<[1], [0], [0], [1], [0, 0, 1, 1], [], []>} : vector<32x2xbf16>, vector<2x512xbf16>, vector<32x512xf32> -> vector<32x512xf32>
    %55 = arith.mulf %39, %54 : vector<32x512xf32>
    %56 = arith.truncf %55 : vector<32x512xf32> to vector<32x512xbf16>
    %c0_41 = arith.constant 0 : index
    %c0_42 = arith.constant 0 : index
    %57 = vector.load %arg14[%c0_41, %c0_42] : memref<32x512xbf16, #tpu.memory_space<vmem>>, vector<32x512xbf16>
    tpu.vector_store %arg14[%c0_41, %c0_42], %56 {strides = array<i32>} : memref<32x512xbf16, #tpu.memory_space<vmem>>, vector<32x512xbf16>,
    return
  }
  func.func @transform_0(%arg0: i32) -> (i32, i32) {
    %c0_i32 = arith.constant 0 : i32
    %c0_i32_0 = arith.constant 0 : i32
    return %c0_i32, %arg0 : i32, i32
  }
  func.func @transform_1(%arg0: i32) -> (i32, i32) {
    %c0_i32 = arith.constant 0 : i32
    %c0_i32_0 = arith.constant 0 : i32
    %c0_i32_1 = arith.constant 0 : i32
    return %c0_i32, %c0_i32_0 : i32, i32
  }
  func.func @transform_2(%arg0: i32) -> (i32, i32) {
    %c0_i32 = arith.constant 0 : i32
    %c0_i32_0 = arith.constant 0 : i32
    %c0_i32_1 = arith.constant 0 : i32
    return %c0_i32, %c0_i32_0 : i32, i32
  }
  func.func @transform_3(%arg0: i32) -> (i32, i32) {
    %c0_i32 = arith.constant 0 : i32
    %c0_i32_0 = arith.constant 0 : i32
    %c0_i32_1 = arith.constant 0 : i32
    return %c0_i32, %c0_i32_0 : i32, i32
  }
  func.func @transform_4(%arg0: i32) -> (i32, i32) {
    %c0_i32 = arith.constant 0 : i32
    %c0_i32_0 = arith.constant 0 : i32
    %c0_i32_1 = arith.constant 0 : i32
    return %c0_i32, %c0_i32_0 : i32, i32
  }
  func.func @transform_5(%arg0: i32) -> (i32, i32) {
    %c0_i32 = arith.constant 0 : i32
    %c0_i32_0 = arith.constant 0 : i32
    %c0_i32_1 = arith.constant 0 : i32
    return %c0_i32, %c0_i32_0 : i32, i32
  }
  func.func @transform_6(%arg0: i32) -> (i32, i32) {
    %c0_i32 = arith.constant 0 : i32
    %c0_i32_0 = arith.constant 0 : i32
    %c0_i32_1 = arith.constant 0 : i32
    return %c0_i32, %c0_i32_0 : i32, i32
  }
  func.func @transform_7(%arg0: i32) -> (i32, i32) {
    %c0_i32 = arith.constant 0 : i32
    %c0_i32_0 = arith.constant 0 : i32
    %c0_i32_1 = arith.constant 0 : i32
    return %c0_i32, %c0_i32_0 : i32, i32
  }
  func.func @transform_8(%arg0: i32) -> (i32, i32) {
    %c0_i32 = arith.constant 0 : i32
    %c0_i32_0 = arith.constant 0 : i32
    %c0_i32_1 = arith.constant 0 : i32
    return %c0_i32, %c0_i32_0 : i32, i32
  }
  func.func @transform_9(%arg0: i32) -> (i32, i32) {
    %c0_i32 = arith.constant 0 : i32
    %c0_i32_0 = arith.constant 0 : i32
    %c0_i32_1 = arith.constant 0 : i32
    return %c0_i32, %c0_i32_0 : i32, i32
  }
  func.func @transform_10(%arg0: i32) -> (i32, i32) {
    %c0_i32 = arith.constant 0 : i32
    %c0_i32_0 = arith.constant 0 : i32
    %c0_i32_1 = arith.constant 0 : i32
    return %c0_i32, %c0_i32_0 : i32, i32
  }
  func.func @transform_11(%arg0: i32) -> (i32, i32) {
    %c0_i32 = arith.constant 0 : i32
    %c0_i32_0 = arith.constant 0 : i32
    %c0_i32_1 = arith.constant 0 : i32
    return %c0_i32, %c0_i32_0 : i32, i32
  }
  func.func @transform_12(%arg0: i32) -> (i32, i32) {
    %c0_i32 = arith.constant 0 : i32
    %c0_i32_0 = arith.constant 0 : i32
    %c0_i32_1 = arith.constant 0 : i32
    return %c0_i32, %c0_i32_0 : i32, i32
  }
  func.func @transform_13(%arg0: i32) -> (i32, i32) {
    %c0_i32 = arith.constant 0 : i32
    %c0_i32_0 = arith.constant 0 : i32
    return %c0_i32, %arg0 : i32, i32
  }
}

</mosaic_0001>

<llo_original>
// kernel: tpu_custom_call.1
$region0: #{tpu_custom_call.1}
  #allocation0 [shape = 'u32[]', space=smem, size = 0x4, offset = 0x4, fixed_abs, tag = 'smem constant byte address 0x4 - core index']
  #allocation1 [shape = 'u32[144,128]{1,0:T(1,128)}', space=vmem, size = 0x12000, scoped, tag = 'internal scratch']
  %s0 = inlined_call_operand.vmem [shape: bf16[32,512], index: 0, kind: input, shape index: {}]
  %s1 = inlined_call_operand.vmem [shape: bf16[32,32], index: 1, kind: input, shape index: {}]
  %s2 = inlined_call_operand.vmem [shape: bf16[32,8], index: 2, kind: input, shape index: {}]
  %s3 = inlined_call_operand.vmem [shape: f32[32,1], index: 3, kind: input, shape index: {}]
  %s4 = inlined_call_operand.vmem [shape: bf16[32,32], index: 4, kind: input, shape index: {}]
  %s5 = inlined_call_operand.vmem [shape: f32[32,1], index: 5, kind: input, shape index: {}]
  %s6 = inlined_call_operand.vmem [shape: f32[1,8], index: 6, kind: input, shape index: {}]
  %s7 = inlined_call_operand.vmem [shape: f32[8,1], index: 7, kind: input, shape index: {}]
  %s8 = inlined_call_operand.vmem [shape: f32[4,32], index: 8, kind: input, shape index: {}]
  %s9 = inlined_call_operand.vmem [shape: f32[32,4], index: 9, kind: input, shape index: {}]
  %s10 = inlined_call_operand.vmem [shape: bf16[8,32], index: 10, kind: input, shape index: {}]
  %s11 = inlined_call_operand.vmem [shape: bf16[512,2], index: 11, kind: input, shape index: {}]
  %s12 = inlined_call_operand.vmem [shape: bf16[2,512], index: 12, kind: input, shape index: {}]
  %s13 = inlined_call_operand.hbm [shape: bf16[32,512], index: 13, kind: output, shape index: {}]
  %s14 = sld [smem:[#allocation0]]
  $region62: #{tpu_custom_call.1} parent=0
    _
  %s16 = ssub.s32 1, %s14
  %s17 = scalar_select 0, %s16, %s14
  $region1: #{tpu_custom_call.1} parent=0
    #allocation2 [shape = 'u8[32768]{0}', space=vmem, size = 0x8000, scoped, tag = 'output window, operand 0, single buffered']
    #allocation3 [shape = 's32[1]{0}', space=sflag, size = 0x4, scoped, tag = 'scoped memory for tpu_custom_call.1']
    %18 = vsyncpa [#allocation3], 0
    // Predicated region
    $region2: #{tpu_custom_call.1} parent=1 // pred_check
      _
    $region3: #{tpu_custom_call.1} parent=1 // pred_check_branch
      %20 = sbr.rel (0) target = $region5
    $region4: #{tpu_custom_call.1} parent=1 // pred_region
      _
    $region5: #{tpu_custom_call.1} parent=1 // pred_fallthru
      _
    // Predicated region
    $region6: #{tpu_custom_call.1} parent=1 // pred_check
      _
    $region7: #{tpu_custom_call.1} parent=1 // pred_check_branch
      %22 = sbr.rel (0) target = $region9
    $region8: #{tpu_custom_call.1} parent=1 // pred_region
      _
    $region9: #{tpu_custom_call.1} parent=1 // pred_fallthru
      _
    // Predicated region
    $region10: #{tpu_custom_call.1} parent=1 // pred_check
      _
    $region11: #{tpu_custom_call.1} parent=1 // pred_check_branch
      %24 = sbr.rel (0) target = $region13
    $region12: #{tpu_custom_call.1} parent=1 // pred_region
      _
    $region13: #{tpu_custom_call.1} parent=1 // pred_fallthru
      _
    // Predicated region
    $region14: #{tpu_custom_call.1} parent=1 // pred_check
      _
    $region15: #{tpu_custom_call.1} parent=1 // pred_check_branch
      %26 = sbr.rel (0) target = $region17
    $region16: #{tpu_custom_call.1} parent=1 // pred_region
      _
    $region17: #{tpu_custom_call.1} parent=1 // pred_fallthru
      _
    // Predicated region
    $region18: #{tpu_custom_call.1} parent=1 // pred_check
      _
    $region19: #{tpu_custom_call.1} parent=1 // pred_check_branch
      %28 = sbr.rel (0) target = $region21
    $region20: #{tpu_custom_call.1} parent=1 // pred_region
      _
    $region21: #{tpu_custom_call.1} parent=1 // pred_fallthru
      _
    // Predicated region
    $region22: #{tpu_custom_call.1} parent=1 // pred_check
      _
    $region23: #{tpu_custom_call.1} parent=1 // pred_check_branch
      %30 = sbr.rel (0) target = $region25
    $region24: #{tpu_custom_call.1} parent=1 // pred_region
      _
    $region25: #{tpu_custom_call.1} parent=1 // pred_fallthru
      _
    // Predicated region
    $region26: #{tpu_custom_call.1} parent=1 // pred_check
      _
    $region27: #{tpu_custom_call.1} parent=1 // pred_check_branch
      %32 = sbr.rel (0) target = $region29
    $region28: #{tpu_custom_call.1} parent=1 // pred_region
      _
    $region29: #{tpu_custom_call.1} parent=1 // pred_fallthru
      _
    // Predicated region
    $region30: #{tpu_custom_call.1} parent=1 // pred_check
      _
    $region31: #{tpu_custom_call.1} parent=1 // pred_check_branch
      %34 = sbr.rel (0) target = $region33
    $region32: #{tpu_custom_call.1} parent=1 // pred_region
      _
    $region33: #{tpu_custom_call.1} parent=1 // pred_fallthru
      _
    // Predicated region
    $region34: #{tpu_custom_call.1} parent=1 // pred_check
      _
    $region35: #{tpu_custom_call.1} parent=1 // pred_check_branch
      %36 = sbr.rel (0) target = $region37
    $region36: #{tpu_custom_call.1} parent=1 // pred_region
      _
    $region37: #{tpu_custom_call.1} parent=1 // pred_fallthru
      _
    // Predicated region
    $region38: #{tpu_custom_call.1} parent=1 // pred_check
      _
    $region39: #{tpu_custom_call.1} parent=1 // pred_check_branch
      %38 = sbr.rel (0) target = $region41
    $region40: #{tpu_custom_call.1} parent=1 // pred_region
      _
    $region41: #{tpu_custom_call.1} parent=1 // pred_fallthru
      _
    // Predicated region
    $region42: #{tpu_custom_call.1} parent=1 // pred_check
      _
    $region43: #{tpu_custom_call.1} parent=1 // pred_check_branch
      %40 = sbr.rel (0) target = $region45
    $region44: #{tpu_custom_call.1} parent=1 // pred_region
      _
    $region45: #{tpu_custom_call.1} parent=1 // pred_fallthru
      _
    // Predicated region
    $region46: #{tpu_custom_call.1} parent=1 // pred_check
      _
    $region47: #{tpu_custom_call.1} parent=1 // pred_check_branch
      %42 = sbr.rel (0) target = $region49
    $region48: #{tpu_custom_call.1} parent=1 // pred_region
      _
    $region49: #{tpu_custom_call.1} parent=1 // pred_fallthru
      _
    // Predicated region
    $region50: #{tpu_custom_call.1} parent=1 // pred_check
      _
    $region51: #{tpu_custom_call.1} parent=1 // pred_check_branch
      %44 = sbr.rel (0) target = $region53
    $region52: #{tpu_custom_call.1} parent=1 // pred_region
      _
    $region53: #{tpu_custom_call.1} parent=1 // pred_fallthru
      _
    %v46 = vld [vmem:[%s0] sm:$0xff]
    %v47 = vld [vmem:[%s0 + $0x8] sm:$0xff]
    %v48 = vld [vmem:[%s0 + $0x10] sm:$0xff]
    %v49 = vld [vmem:[%s0 + $0x18] sm:$0xff]
    %v50 = vld [vmem:[%s0 + $0x20] sm:$0xff]
    %v51 = vld [vmem:[%s0 + $0x28] sm:$0xff]
    %v52 = vld [vmem:[%s0 + $0x30] sm:$0xff]
    %v53 = vld [vmem:[%s0 + $0x38] sm:$0xff]
    %v54 = vld [vmem:[%s11] sm:$0xf]
    %v55 = vld [vmem:[%s11 + $0x4] sm:$0xf]
    %v56 = vld [vmem:[%s11 + $0x8] sm:$0xf]
    %v57 = vld [vmem:[%s11 + $0xc] sm:$0xf]
    %v58 = vld [vmem:[%s11 + $0x10] sm:$0xf]
    %v59 = vld [vmem:[%s11 + $0x14] sm:$0xf]
    %v60 = vld [vmem:[%s11 + $0x18] sm:$0xf]
    %v61 = vld [vmem:[%s11 + $0x1c] sm:$0xf]
    %v62 = vld [vmem:[%s11 + $0x20] sm:$0xf]
    %v63 = vld [vmem:[%s11 + $0x24] sm:$0xf]
    %v64 = vld [vmem:[%s11 + $0x28] sm:$0xf]
    %v65 = vld [vmem:[%s11 + $0x2c] sm:$0xf]
    %v66 = vld [vmem:[%s11 + $0x30] sm:$0xf]
    %v67 = vld [vmem:[%s11 + $0x34] sm:$0xf]
    %v68 = vld [vmem:[%s11 + $0x38] sm:$0xf]
    %v69 = vld [vmem:[%s11 + $0x3c] sm:$0xf]
    %v70 = vld [vmem:[%s11 + $0x40] sm:$0xf]
    %v71 = vld [vmem:[%s11 + $0x44] sm:$0xf]
    %v72 = vld [vmem:[%s11 + $0x48] sm:$0xf]
    %v73 = vld [vmem:[%s11 + $0x4c] sm:$0xf]
    %v74 = vld [vmem:[%s11 + $0x50] sm:$0xf]
    %v75 = vld [vmem:[%s11 + $0x54] sm:$0xf]
    %v76 = vld [vmem:[%s11 + $0x58] sm:$0xf]
    %v77 = vld [vmem:[%s11 + $0x5c] sm:$0xf]
    %v78 = vld [vmem:[%s11 + $0x60] sm:$0xf]
    %v79 = vld [vmem:[%s11 + $0x64] sm:$0xf]
    %v80 = vld [vmem:[%s11 + $0x68] sm:$0xf]
    %v81 = vld [vmem:[%s11 + $0x6c] sm:$0xf]
    %v82 = vld [vmem:[%s11 + $0x70] sm:$0xf]
    %v83 = vld [vmem:[%s11 + $0x74] sm:$0xf]
    %v84 = vld [vmem:[%s11 + $0x78] sm:$0xf]
    %v85 = vld [vmem:[%s11 + $0x7c] sm:$0xf]
    %v86 = vld [vmem:[%s11 + $0x80] sm:$0xf]
    %v87 = vld [vmem:[%s11 + $0x84] sm:$0xf]
    %v88 = vld [vmem:[%s11 + $0x88] sm:$0xf]
    %v89 = vld [vmem:[%s11 + $0x8c] sm:$0xf]
    %v90 = vld [vmem:[%s11 + $0x90] sm:$0xf]
    %v91 = vld [vmem:[%s11 + $0x94] sm:$0xf]
    %v92 = vld [vmem:[%s11 + $0x98] sm:$0xf]
    %v93 = vld [vmem:[%s11 + $0x9c] sm:$0xf]
    %v94 = vld [vmem:[%s11 + $0xa0] sm:$0xf]
    %v95 = vld [vmem:[%s11 + $0xa4] sm:$0xf]
    %v96 = vld [vmem:[%s11 + $0xa8] sm:$0xf]
    %v97 = vld [vmem:[%s11 + $0xac] sm:$0xf]
    %v98 = vld [vmem:[%s11 + $0xb0] sm:$0xf]
    %v99 = vld [vmem:[%s11 + $0xb4] sm:$0xf]
    %v100 = vld [vmem:[%s11 + $0xb8] sm:$0xf]
    %v101 = vld [vmem:[%s11 + $0xbc] sm:$0xf]
    %v102 = vld [vmem:[%s11 + $0xc0] sm:$0xf]
    %v103 = vld [vmem:[%s11 + $0xc4] sm:$0xf]
    %v104 = vld [vmem:[%s11 + $0xc8] sm:$0xf]
    %v105 = vld [vmem:[%s11 + $0xcc] sm:$0xf]
    %v106 = vld [vmem:[%s11 + $0xd0] sm:$0xf]
    %v107 = vld [vmem:[%s11 + $0xd4] sm:$0xf]
    %v108 = vld [vmem:[%s11 + $0xd8] sm:$0xf]
    %v109 = vld [vmem:[%s11 + $0xdc] sm:$0xf]
    %v110 = vld [vmem:[%s11 + $0xe0] sm:$0xf]
    %v111 = vld [vmem:[%s11 + $0xe4] sm:$0xf]
    %v112 = vld [vmem:[%s11 + $0xe8] sm:$0xf]
    %v113 = vld [vmem:[%s11 + $0xec] sm:$0xf]
    %v114 = vld [vmem:[%s11 + $0xf0] sm:$0xf]
    %v115 = vld [vmem:[%s11 + $0xf4] sm:$0xf]
    %v116 = vld [vmem:[%s11 + $0xf8] sm:$0xf]
    %v117 = vld [vmem:[%s11 + $0xfc] sm:$0xf]
    %v118 = vld [vmem:[%s12] sm:$0xf]
    %v119 = vld [vmem:[%s10] sm:$0xf]
    %v128 = vunpack.c.l.b16 %v46
    %v129 = vunpack.c.h.b16 %v46
    %v130 = vunpack.c.l.b16 %v47
    %v131 = vunpack.c.h.b16 %v47
    %v132 = vunpack.c.l.b16 %v48
    %v133 = vunpack.c.h.b16 %v48
    %v134 = vunpack.c.l.b16 %v49
    %v135 = vunpack.c.h.b16 %v49
    %v136 = vunpack.c.l.b16 %v50
    %v137 = vunpack.c.h.b16 %v50
    %v138 = vunpack.c.l.b16 %v51
    %v139 = vunpack.c.h.b16 %v51
    %v140 = vunpack.c.l.b16 %v52
    %v141 = vunpack.c.h.b16 %v52
    %v142 = vunpack.c.l.b16 %v53
    %v143 = vunpack.c.h.b16 %v53
    %v144 = vpack.c.b16 %v132, %v128
    %v145 = vpack.c.b16 %v133, %v129
    %v146 = vpack.c.b16 %v134, %v130
    %v147 = vpack.c.b16 %v135, %v131
    %v148 = vpack.c.b16 %v140, %v136
    %v149 = vpack.c.b16 %v141, %v137
    %v150 = vpack.c.b16 %v142, %v138
    %v151 = vpack.c.b16 %v143, %v139
    %vm160 = vcmask 261120
    %v162 = vsel %vm160, %v119, 0
    %164 = vmatprep.subr.bf16.mxu0 %v145
    %165 = vmatpush1.bf16.msra.mxu0 %v144
    %166 = vmatprep.subr.bf16.mxu0 %v149
    %167 = vmatpush1.bf16.msra.mxu0 %v148
    %168 = vmatprep.subr.bf16.mxu0 0
    %169 = vmatpush1.bf16.msra.mxu0 0
    %170 = vmatprep.subr.bf16.mxu0 0
    %171 = vmatpush1.bf16.msra.mxu0 0
    %172 = vmatprep.subr.bf16.mxu0 0
    %173 = vmatpush1.bf16.msra.mxu0 0
    %174 = vmatprep.subr.bf16.mxu0 0
    %175 = vmatpush1.bf16.msra.mxu0 0
    %176 = vmatprep.subr.bf16.mxu0 0
    %177 = vmatpush1.bf16.msra.mxu0 0
    %178 = vmatprep.subr.bf16.mxu0 0
    %179 = vmatpush1.bf16.msra.mxu0 0
    %180 = vmatprep.subr.bf16.mxu0 0
    %181 = vmatpush1.bf16.msra.mxu0 0
    %182 = vmatprep.subr.bf16.mxu0 0
    %183 = vmatpush1.bf16.msra.mxu0 0
    %184 = vmatprep.subr.bf16.mxu0 0
    %185 = vmatpush1.bf16.msra.mxu0 0
    %186 = vmatprep.subr.bf16.mxu0 0
    %187 = vmatpush1.bf16.msra.mxu0 0
    %188 = vmatprep.subr.bf16.mxu0 0
    %189 = vmatpush1.bf16.msra.mxu0 0
    %190 = vmatprep.subr.bf16.mxu0 0
    %191 = vmatpush1.bf16.msra.mxu0 0
    %192 = vmatprep.subr.bf16.mxu0 0
    %193 = vmatpush1.bf16.msra.mxu0 0
    %194 = vmatprep.subr.bf16.mxu0 0
    %195 = vmatpush1.bf16.msra.mxu0 0
    %196 = vmatprep.mubr.bf16.mxu0 0
    %197 = vmatmul.mubr.bf16.gmra.mrb[0].mxu0 %v162
    %v198 = vpop.f32.mrb[0].mxu0
    %v199 = vadd.f32 0.0, %v198
    %v200 = vpop.f32.mrb[0].mxu0
    %v201 = vadd.f32 0.0, %v200
    %v202 = vpop.f32.mrb[0].mxu0
    %v203 = vpop.f32.mrb[0].mxu0
    %204 = vdwg.mxu0
    %205 = vmatprep.subr.bf16.mxu0 %v147
    %206 = vmatpush1.bf16.msra.mxu0 %v146
    %207 = vmatprep.subr.bf16.mxu0 %v151
    %208 = vmatpush1.bf16.msra.mxu0 %v150
    %209 = vmatprep.subr.bf16.mxu0 0
    %210 = vmatpush1.bf16.msra.mxu0 0
    %211 = vmatprep.subr.bf16.mxu0 0
    %212 = vmatpush1.bf16.msra.mxu0 0
    %213 = vmatprep.subr.bf16.mxu0 0
    %214 = vmatpush1.bf16.msra.mxu0 0
    %215 = vmatprep.subr.bf16.mxu0 0
    %216 = vmatpush1.bf16.msra.mxu0 0
    %217 = vmatprep.subr.bf16.mxu0 0
    %218 = vmatpush1.bf16.msra.mxu0 0
    %219 = vmatprep.subr.bf16.mxu0 0
    %220 = vmatpush1.bf16.msra.mxu0 0
    %221 = vmatprep.subr.bf16.mxu0 0
    %222 = vmatpush1.bf16.msra.mxu0 0
    %223 = vmatprep.subr.bf16.mxu0 0
    %224 = vmatpush1.bf16.msra.mxu0 0
    %225 = vmatprep.subr.bf16.mxu0 0
    %226 = vmatpush1.bf16.msra.mxu0 0
    %227 = vmatprep.subr.bf16.mxu0 0
    %228 = vmatpush1.bf16.msra.mxu0 0
    %229 = vmatprep.subr.bf16.mxu0 0
    %230 = vmatpush1.bf16.msra.mxu0 0
    %231 = vmatprep.subr.bf16.mxu0 0
    %232 = vmatpush1.bf16.msra.mxu0 0
    %233 = vmatprep.subr.bf16.mxu0 0
    %234 = vmatpush1.bf16.msra.mxu0 0
    %235 = vmatprep.subr.bf16.mxu0 0
    %236 = vmatpush1.bf16.msra.mxu0 0
    %237 = vmatprep.mubr.bf16.mxu0 0
    %238 = vmatmul.mubr.bf16.gmra.mrb[0].mxu0 %v162
    %v239 = vpop.f32.mrb[0].mxu0
    %v240 = vadd.f32 0.0, %v239
    %v241 = vpop.f32.mrb[0].mxu0
    %v242 = vadd.f32 0.0, %v241
    %v243 = vpop.f32.mrb[0].mxu0
    %v244 = vpop.f32.mrb[0].mxu0
    %245 = vdwg.mxu0
    %v246 = vpack.c.bf16 %v199, %v199
    %v247 = vpack.c.bf16 %v201, %v201
    %v248 = vpack.c.bf16 %v240, %v240
    %v249 = vpack.c.bf16 %v242, %v242
    %v314 = vunpack.c.l.b16 %v54
    %v315 = vunpack.c.l.b16 %v55
    %v316 = vunpack.c.l.b16 %v56
    %v317 = vunpack.c.l.b16 %v57
    %v318 = vunpack.c.l.b16 %v58
    %v319 = vunpack.c.l.b16 %v59
    %v320 = vunpack.c.l.b16 %v60
    %v321 = vunpack.c.l.b16 %v61
    %v322 = vunpack.c.l.b16 %v62
    %v323 = vunpack.c.l.b16 %v63
    %v324 = vunpack.c.l.b16 %v64
    %v325 = vunpack.c.l.b16 %v65
    %v326 = vunpack.c.l.b16 %v66
    %v327 = vunpack.c.l.b16 %v67
    %v328 = vunpack.c.l.b16 %v68
    %v329 = vunpack.c.l.b16 %v69
    %v330 = vunpack.c.l.b16 %v70
    %v331 = vunpack.c.l.b16 %v71
    %v332 = vunpack.c.l.b16 %v72
    %v333 = vunpack.c.l.b16 %v73
    %v334 = vunpack.c.l.b16 %v74
    %v335 = vunpack.c.l.b16 %v75
    %v336 = vunpack.c.l.b16 %v76
    %v337 = vunpack.c.l.b16 %v77
    %v338 = vunpack.c.l.b16 %v78
    %v339 = vunpack.c.l.b16 %v79
    %v340 = vunpack.c.l.b16 %v80
    %v341 = vunpack.c.l.b16 %v81
    %v342 = vunpack.c.l.b16 %v82
    %v343 = vunpack.c.l.b16 %v83
    %v344 = vunpack.c.l.b16 %v84
    %v345 = vunpack.c.l.b16 %v85
    %v346 = vunpack.c.l.b16 %v86
    %v347 = vunpack.c.l.b16 %v87
    %v348 = vunpack.c.l.b16 %v88
    %v349 = vunpack.c.l.b16 %v89
    %v350 = vunpack.c.l.b16 %v90
    %v351 = vunpack.c.l.b16 %v91
    %v352 = vunpack.c.l.b16 %v92
    %v353 = vunpack.c.l.b16 %v93
    %v354 = vunpack.c.l.b16 %v94
    %v355 = vunpack.c.l.b16 %v95
    %v356 = vunpack.c.l.b16 %v96
    %v357 = vunpack.c.l.b16 %v97
    %v358 = vunpack.c.l.b16 %v98
    %v359 = vunpack.c.l.b16 %v99
    %v360 = vunpack.c.l.b16 %v100
    %v361 = vunpack.c.l.b16 %v101
    %v362 = vunpack.c.l.b16 %v102
    %v363 = vunpack.c.l.b16 %v103
    %v364 = vunpack.c.l.b16 %v104
    %v365 = vunpack.c.l.b16 %v105
    %v366 = vunpack.c.l.b16 %v106
    %v367 = vunpack.c.l.b16 %v107
    %v368 = vunpack.c.l.b16 %v108
    %v369 = vunpack.c.l.b16 %v109
    %v370 = vunpack.c.l.b16 %v110
    %v371 = vunpack.c.l.b16 %v111
    %v372 = vunpack.c.l.b16 %v112
    %v373 = vunpack.c.l.b16 %v113
    %v374 = vunpack.c.l.b16 %v114
    %v375 = vunpack.c.l.b16 %v115
    %v376 = vunpack.c.l.b16 %v116
    %v377 = vunpack.c.l.b16 %v117
    %v378 = vpack.c.b16 %v315, %v314
    %v379 = vpack.c.b16 %v317, %v316
    %v380 = vpack.c.b16 %v319, %v318
    %v381 = vpack.c.b16 %v321, %v320
    %v382 = vpack.c.b16 %v323, %v322
    %v383 = vpack.c.b16 %v325, %v324
    %v384 = vpack.c.b16 %v327, %v326
    %v385 = vpack.c.b16 %v329, %v328
    %v386 = vpack.c.b16 %v331, %v330
    %v387 = vpack.c.b16 %v333, %v332
    %v388 = vpack.c.b16 %v335, %v334
    %v389 = vpack.c.b16 %v337, %v336
    %v390 = vpack.c.b16 %v339, %v338
    %v391 = vpack.c.b16 %v341, %v340
    %v392 = vpack.c.b16 %v343, %v342
    %v393 = vpack.c.b16 %v345, %v344
    %v394 = vpack.c.b16 %v347, %v346
    %v395 = vpack.c.b16 %v349, %v348
    %v396 = vpack.c.b16 %v351, %v350
    %v397 = vpack.c.b16 %v353, %v352
    %v398 = vpack.c.b16 %v355, %v354
    %v399 = vpack.c.b16 %v357, %v356
    %v400 = vpack.c.b16 %v359, %v358
    %v401 = vpack.c.b16 %v361, %v360
    %v402 = vpack.c.b16 %v363, %v362
    %v403 = vpack.c.b16 %v365, %v364
    %v404 = vpack.c.b16 %v367, %v366
    %v405 = vpack.c.b16 %v369, %v368
    %v406 = vpack.c.b16 %v371, %v370
    %v407 = vpack.c.b16 %v373, %v372
    %v408 = vpack.c.b16 %v375, %v374
    %v409 = vpack.c.b16 %v377, %v376
    %442 = vmatprep.subr.bf16.mxu0 0
    %443 = vmatpush1.bf16.msra.mxu0 %v378
    %444 = vmatprep.subr.bf16.mxu0 0
    %445 = vmatpush1.bf16.msra.mxu0 %v379
    %446 = vmatprep.subr.bf16.mxu0 0
    %447 = vmatpush1.bf16.msra.mxu0 %v380
    %448 = vmatprep.subr.bf16.mxu0 0
    %449 = vmatpush1.bf16.msra.mxu0 %v381
    %450 = vmatprep.subr.bf16.mxu0 0
    %451 = vmatpush1.bf16.msra.mxu0 %v382
    %452 = vmatprep.subr.bf16.mxu0 0
    %453 = vmatpush1.bf16.msra.mxu0 %v383
    %454 = vmatprep.subr.bf16.mxu0 0
    %455 = vmatpush1.bf16.msra.mxu0 %v384
    %456 = vmatprep.subr.bf16.mxu0 0
    %457 = vmatpush1.bf16.msra.mxu0 %v385
    %458 = vmatprep.subr.bf16.mxu0 0
    %459 = vmatpush1.bf16.msra.mxu0 %v386
    %460 = vmatprep.subr.bf16.mxu0 0
    %461 = vmatpush1.bf16.msra.mxu0 %v387
    %462 = vmatprep.subr.bf16.mxu0 0
    %463 = vmatpush1.bf16.msra.mxu0 %v388
    %464 = vmatprep.subr.bf16.mxu0 0
    %465 = vmatpush1.bf16.msra.mxu0 %v389
    %466 = vmatprep.subr.bf16.mxu0 0
    %467 = vmatpush1.bf16.msra.mxu0 %v390
    %468 = vmatprep.subr.bf16.mxu0 0
    %469 = vmatpush1.bf16.msra.mxu0 %v391
    %470 = vmatprep.subr.bf16.mxu0 0
    %471 = vmatpush1.bf16.msra.mxu0 %v392
    %472 = vmatprep.subr.bf16.mxu0 0
    %473 = vmatpush1.bf16.msra.mxu0 %v393
    %474 = vmatprep.mubr.bf16.mxu0 %v247
    %475 = vmatmul.mubr.bf16.gmra.mrb[0].mxu0 %v246
    %v476 = vpop.f32.mrb[0].mxu0
    %v477 = vadd.f32 0.0, %v476
    %v478 = vpop.f32.mrb[0].mxu0
    %v479 = vpop.f32.mrb[0].mxu0
    %v480 = vpop.f32.mrb[0].mxu0
    %481 = vdwg.mxu0
    %482 = vmatprep.subr.bf16.mxu0 0
    %483 = vmatpush1.bf16.msra.mxu0 %v394
    %484 = vmatprep.subr.bf16.mxu0 0
    %485 = vmatpush1.bf16.msra.mxu0 %v395
    %486 = vmatprep.subr.bf16.mxu0 0
    %487 = vmatpush1.bf16.msra.mxu0 %v396
    %488 = vmatprep.subr.bf16.mxu0 0
    %489 = vmatpush1.bf16.msra.mxu0 %v397
    %490 = vmatprep.subr.bf16.mxu0 0
    %491 = vmatpush1.bf16.msra.mxu0 %v398
    %492 = vmatprep.subr.bf16.mxu0 0
    %493 = vmatpush1.bf16.msra.mxu0 %v399
    %494 = vmatprep.subr.bf16.mxu0 0
    %495 = vmatpush1.bf16.msra.mxu0 %v400
    %496 = vmatprep.subr.bf16.mxu0 0
    %497 = vmatpush1.bf16.msra.mxu0 %v401
    %498 = vmatprep.subr.bf16.mxu0 0
    %499 = vmatpush1.bf16.msra.mxu0 %v402
    %500 = vmatprep.subr.bf16.mxu0 0
    %501 = vmatpush1.bf16.msra.mxu0 %v403
    %502 = vmatprep.subr.bf16.mxu0 0
    %503 = vmatpush1.bf16.msra.mxu0 %v404
    %504 = vmatprep.subr.bf16.mxu0 0
    %505 = vmatpush1.bf16.msra.mxu0 %v405
    %506 = vmatprep.subr.bf16.mxu0 0
    %507 = vmatpush1.bf16.msra.mxu0 %v406
    %508 = vmatprep.subr.bf16.mxu0 0
    %509 = vmatpush1.bf16.msra.mxu0 %v407
    %510 = vmatprep.subr.bf16.mxu0 0
    %511 = vmatpush1.bf16.msra.mxu0 %v408
    %512 = vmatprep.subr.bf16.mxu0 0
    %513 = vmatpush1.bf16.msra.mxu0 %v409
    %514 = vmatprep.mubr.bf16.mxu0 %v249
    %515 = vmatmul.mubr.bf16.gmra.mrb[0].mxu0 %v248
    %v516 = vpop.f32.mrb[0].mxu0
    %v517 = vadd.f32 %v477, %v516
    %v518 = vpop.f32.mrb[0].mxu0
    %v519 = vpop.f32.mrb[0].mxu0
    %v520 = vpop.f32.mrb[0].mxu0
    %521 = vdwg.mxu0
    %v522 = vld [vmem:[%s6] sm:$0x1]
    %vm523 = vcmask 64512
    %v525 = vsel %vm523, %v522, 0
    %527 = vmatprep.subr.mxu0 0.0
    %528 = vmatpush1.msra.mxu0 %v517
    %529 = vmatprep.subr.mxu0 0.0
    %530 = vmatpush1.msra.mxu0 0.0
    %531 = vmatprep.subr.mxu0 0.0
    %532 = vmatpush1.msra.mxu0 0.0
    %533 = vmatprep.subr.mxu0 0.0
    %534 = vmatpush1.msra.mxu0 0.0
    %535 = vmatprep.subr.mxu0 0.0
    %536 = vmatpush1.msra.mxu0 0.0
    %537 = vmatprep.subr.mxu0 0.0
    %538 = vmatpush1.msra.mxu0 0.0
    %539 = vmatprep.subr.mxu0 0.0
    %540 = vmatpush1.msra.mxu0 0.0
    %541 = vmatprep.subr.mxu0 0.0
    %542 = vmatpush1.msra.mxu0 0.0
    %543 = vmatprep.subr.mxu0 0.0
    %544 = vmatpush1.msra.mxu0 0.0
    %545 = vmatprep.subr.mxu0 0.0
    %546 = vmatpush1.msra.mxu0 0.0
    %547 = vmatprep.subr.mxu0 0.0
    %548 = vmatpush1.msra.mxu0 0.0
    %549 = vmatprep.subr.mxu0 0.0
    %550 = vmatpush1.msra.mxu0 0.0
    %551 = vmatprep.subr.mxu0 0.0
    %552 = vmatpush1.msra.mxu0 0.0
    %553 = vmatprep.subr.mxu0 0.0
    %554 = vmatpush1.msra.mxu0 0.0
    %555 = vmatprep.subr.mxu0 0.0
    %556 = vmatpush1.msra.mxu0 0.0
    %557 = vmatprep.subr.mxu0 0.0
    %558 = vmatpush1.msra.mxu0 0.0
    %559 = vmatprep.subr.mxu0 0.0
    %560 = vmatpush1.msra.mxu0 0.0
    %561 = vmatprep.subr.mxu0 0.0
    %562 = vmatpush1.msra.mxu0 0.0
    %563 = vmatprep.subr.mxu0 0.0
    %564 = vmatpush1.msra.mxu0 0.0
    %565 = vmatprep.subr.mxu0 0.0
    %566 = vmatpush1.msra.mxu0 0.0
    %567 = vmatprep.subr.mxu0 0.0
    %568 = vmatpush1.msra.mxu0 0.0
    %569 = vmatprep.subr.mxu0 0.0
    %570 = vmatpush1.msra.mxu0 0.0
    %571 = vmatprep.subr.mxu0 0.0
    %572 = vmatpush1.msra.mxu0 0.0
    %573 = vmatprep.subr.mxu0 0.0
    %574 = vmatpush1.msra.mxu0 0.0
    %575 = vmatprep.subr.mxu0 0.0
    %576 = vmatpush1.msra.mxu0 0.0
    %577 = vmatprep.subr.mxu0 0.0
    %578 = vmatpush1.msra.mxu0 0.0
    %579 = vmatprep.subr.mxu0 0.0
    %580 = vmatpush1.msra.mxu0 0.0
    %581 = vmatprep.subr.mxu0 0.0
    %582 = vmatpush1.msra.mxu0 0.0
    %583 = vmatprep.subr.mxu0 0.0
    %584 = vmatpush1.msra.mxu0 0.0
    %585 = vmatprep.subr.mxu0 0.0
    %586 = vmatpush1.msra.mxu0 0.0
    %587 = vmatprep.subr.mxu0 0.0
    %588 = vmatpush1.msra.mxu0 0.0
    %589 = vmatprep.subr.mxu0 0.0
    %590 = vmatpush1.msra.mxu0 0.0
    %591 = vmatprep.mubr.f32.mxu0 0.0
    %592 = vmatmul.mubr.f32.gmra.mrb[0].mxu0 %v525
    %v593 = vpop.f32.mrb[0].mxu0
    %v594 = vadd.f32 0.0, %v593
    %v595 = vpop.f32.mrb[0].mxu0
    %596 = vdwg.mxu0
    %v597 = vmax.f32 %v594, 0.0
    %v598 = vld [vmem:[%s7] sm:$0xff]
    %vm599 = vcmask 7168
    %v601 = vsel %vm599, %v598, 0
    %vm603 = vcmask 1040384
    %v605 = vsel %vm603, %v597, 0
    %607 = vmatprep.subr.mxu0 0.0
    %608 = vmatpush1.msra.mxu0 %v605
    %609 = vmatprep.subr.mxu0 0.0
    %610 = vmatpush1.msra.mxu0 0.0
    %611 = vmatprep.subr.mxu0 0.0
    %612 = vmatpush1.msra.mxu0 0.0
    %613 = vmatprep.subr.mxu0 0.0
    %614 = vmatpush1.msra.mxu0 0.0
    %615 = vmatprep.subr.mxu0 0.0
    %616 = vmatpush1.msra.mxu0 0.0
    %617 = vmatprep.subr.mxu0 0.0
    %618 = vmatpush1.msra.mxu0 0.0
    %619 = vmatprep.subr.mxu0 0.0
    %620 = vmatpush1.msra.mxu0 0.0
    %621 = vmatprep.subr.mxu0 0.0
    %622 = vmatpush1.msra.mxu0 0.0
    %623 = vmatprep.subr.mxu0 0.0
    %624 = vmatpush1.msra.mxu0 0.0
    %625 = vmatprep.subr.mxu0 0.0
    %626 = vmatpush1.msra.mxu0 0.0
    %627 = vmatprep.subr.mxu0 0.0
    %628 = vmatpush1.msra.mxu0 0.0
    %629 = vmatprep.subr.mxu0 0.0
    %630 = vmatpush1.msra.mxu0 0.0
    %631 = vmatprep.subr.mxu0 0.0
    %632 = vmatpush1.msra.mxu0 0.0
    %633 = vmatprep.subr.mxu0 0.0
    %634 = vmatpush1.msra.mxu0 0.0
    %635 = vmatprep.subr.mxu0 0.0
    %636 = vmatpush1.msra.mxu0 0.0
    %637 = vmatprep.subr.mxu0 0.0
    %638 = vmatpush1.msra.mxu0 0.0
    %639 = vmatprep.subr.mxu0 0.0
    %640 = vmatpush1.msra.mxu0 0.0
    %641 = vmatprep.subr.mxu0 0.0
    %642 = vmatpush1.msra.mxu0 0.0
    %643 = vmatprep.subr.mxu0 0.0
    %644 = vmatpush1.msra.mxu0 0.0
    %645 = vmatprep.subr.mxu0 0.0
    %646 = vmatpush1.msra.mxu0 0.0
    %647 = vmatprep.subr.mxu0 0.0
    %648 = vmatpush1.msra.mxu0 0.0
    %649 = vmatprep.subr.mxu0 0.0
    %650 = vmatpush1.msra.mxu0 0.0
    %651 = vmatprep.subr.mxu0 0.0
    %652 = vmatpush1.msra.mxu0 0.0
    %653 = vmatprep.subr.mxu0 0.0
    %654 = vmatpush1.msra.mxu0 0.0
    %655 = vmatprep.subr.mxu0 0.0
    %656 = vmatpush1.msra.mxu0 0.0
    %657 = vmatprep.subr.mxu0 0.0
    %658 = vmatpush1.msra.mxu0 0.0
    %659 = vmatprep.subr.mxu0 0.0
    %660 = vmatpush1.msra.mxu0 0.0
    %661 = vmatprep.subr.mxu0 0.0
    %662 = vmatpush1.msra.mxu0 0.0
    %663 = vmatprep.subr.mxu0 0.0
    %664 = vmatpush1.msra.mxu0 0.0
    %665 = vmatprep.subr.mxu0 0.0
    %666 = vmatpush1.msra.mxu0 0.0
    %667 = vmatprep.subr.mxu0 0.0
    %668 = vmatpush1.msra.mxu0 0.0
    %669 = vmatprep.subr.mxu0 0.0
    %670 = vmatpush1.msra.mxu0 0.0
    %671 = vmatprep.mubr.f32.mxu0 0.0
    %672 = vmatmul.mubr.f32.gmra.mrb[0].mxu0 %v601
    %v673 = vpop.f32.mrb[0].mxu0
    %v674 = vadd.f32 0.0, %v673
    %v675 = vpop.f32.mrb[0].mxu0
    %676 = vdwg.mxu0
    %v677 = vxor.u32 %v674, 2147483648
    %v678 = vmul.f32 %v677, 1.442695
    %v679 = vpow.pop %v678
    %v680 = vadd.f32 %v679, 1.0
    %v681 = vrcp.pop %v680
    %v682 = vmul.f32 1.0, %v681
    %v683 = vpack.c.bf16 %v682, %v682
    %v686 = vunpack.c.l.s4 1966171168
    %v687 = vunpack.c.0.s8 %v686
    %v688 = vlaneseq
    %v689 = vshrl.u32 %v688, 7
    %v690 = vsub.s32 %v687, %v689
    %v691 = vrot.slane %v118, %v690
    %v692 = vcombine.high %v691, %v691
    %v694 = vunpack.c.l.s4 1966171168
    %v695 = vunpack.c.0.s8 %v694
    %v696 = vlaneseq
    %v697 = vshrl.u32 %v696, 7
    %v698 = vsub.s32 %v695, %v697
    %v699 = vrot.slane %v691, %v698
    %v701 = vunpack.c.l.s4 1966171168
    %v702 = vunpack.c.0.s8 %v701
    %v703 = vlaneseq
    %v704 = vshrl.u32 %v703, 7
    %v705 = vsub.s32 %v702, %v704
    %v706 = vrot.slane %v692, %v705
    %v707 = vcombine.high %v699, %v699
    %v708 = vcombine.high %v706, %v706
    %vm709 = vcmask 15360
    %v711 = vsel %vm709, %v683, 0
    %v714 = vsel %vm603, %v699, 0
    %v717 = vsel %vm603, %v706, 0
    %v720 = vsel %vm603, %v707, 0
    %v723 = vsel %vm603, %v708, 0
    %725 = vmatprep.subr.bf16.mxu0 %v717
    %726 = vmatpush1.bf16.msra.mxu0 %v714
    %727 = vmatprep.subr.bf16.mxu0 0
    %728 = vmatpush1.bf16.msra.mxu0 0
    %729 = vmatprep.subr.bf16.mxu0 0
    %730 = vmatpush1.bf16.msra.mxu0 0
    %731 = vmatprep.subr.bf16.mxu0 0
    %732 = vmatpush1.bf16.msra.mxu0 0
    %733 = vmatprep.subr.bf16.mxu0 0
    %734 = vmatpush1.bf16.msra.mxu0 0
    %735 = vmatprep.subr.bf16.mxu0 0
    %736 = vmatpush1.bf16.msra.mxu0 0
    %737 = vmatprep.subr.bf16.mxu0 0
    %738 = vmatpush1.bf16.msra.mxu0 0
    %739 = vmatprep.subr.bf16.mxu0 0
    %740 = vmatpush1.bf16.msra.mxu0 0
    %741 = vmatprep.subr.bf16.mxu0 0
    %742 = vmatpush1.bf16.msra.mxu0 0
    %743 = vmatprep.subr.bf16.mxu0 0
    %744 = vmatpush1.bf16.msra.mxu0 0
    %745 = vmatprep.subr.bf16.mxu0 0
    %746 = vmatpush1.bf16.msra.mxu0 0
    %747 = vmatprep.subr.bf16.mxu0 0
    %748 = vmatpush1.bf16.msra.mxu0 0
    %749 = vmatprep.subr.bf16.mxu0 0
    %750 = vmatpush1.bf16.msra.mxu0 0
    %751 = vmatprep.subr.bf16.mxu0 0
    %752 = vmatpush1.bf16.msra.mxu0 0
    %753 = vmatprep.subr.bf16.mxu0 0
    %754 = vmatpush1.bf16.msra.mxu0 0
    %755 = vmatprep.subr.bf16.mxu0 0
    %756 = vmatpush1.bf16.msra.mxu0 0
    %757 = vmatprep.mubr.bf16.mxu0 0
    %758 = vmatmul.mubr.bf16.gmra.mrb[0].mxu0 %v711
    %v759 = vpop.f32.mrb[0].mxu0
    %v760 = vadd.f32 0.0, %v759
    %v761 = vpop.f32.mrb[0].mxu0
    %v762 = vadd.f32 0.0, %v761
    %v763 = vpop.f32.mrb[0].mxu0
    %v764 = vpop.f32.mrb[0].mxu0
    %765 = vdwg.mxu0
    %766 = vmatprep.subr.bf16.mxu0 %v723
    %767 = vmatpush1.bf16.msra.mxu0 %v720
    %768 = vmatprep.subr.bf16.mxu0 0
    %769 = vmatpush1.bf16.msra.mxu0 0
    %770 = vmatprep.subr.bf16.mxu0 0
    %771 = vmatpush1.bf16.msra.mxu0 0
    %772 = vmatprep.subr.bf16.mxu0 0
    %773 = vmatpush1.bf16.msra.mxu0 0
    %774 = vmatprep.subr.bf16.mxu0 0
    %775 = vmatpush1.bf16.msra.mxu0 0
    %776 = vmatprep.subr.bf16.mxu0 0
    %777 = vmatpush1.bf16.msra.mxu0 0
    %778 = vmatprep.subr.bf16.mxu0 0
    %779 = vmatpush1.bf16.msra.mxu0 0
    %780 = vmatprep.subr.bf16.mxu0 0
    %781 = vmatpush1.bf16.msra.mxu0 0
    %782 = vmatprep.subr.bf16.mxu0 0
    %783 = vmatpush1.bf16.msra.mxu0 0
    %784 = vmatprep.subr.bf16.mxu0 0
    %785 = vmatpush1.bf16.msra.mxu0 0
    %786 = vmatprep.subr.bf16.mxu0 0
    %787 = vmatpush1.bf16.msra.mxu0 0
    %788 = vmatprep.subr.bf16.mxu0 0
    %789 = vmatpush1.bf16.msra.mxu0 0
    %790 = vmatprep.subr.bf16.mxu0 0
    %791 = vmatpush1.bf16.msra.mxu0 0
    %792 = vmatprep.subr.bf16.mxu0 0
    %793 = vmatpush1.bf16.msra.mxu0 0
    %794 = vmatprep.subr.bf16.mxu0 0
    %795 = vmatpush1.bf16.msra.mxu0 0
    %796 = vmatprep.subr.bf16.mxu0 0
    %797 = vmatpush1.bf16.msra.mxu0 0
    %798 = vmatprep.mubr.bf16.mxu0 0
    %799 = vmatmul.mubr.bf16.gmra.mrb[0].mxu0 %v711
    %v800 = vpop.f32.mrb[0].mxu0
    %v801 = vadd.f32 0.0, %v800
    %v802 = vpop.f32.mrb[0].mxu0
    %v803 = vadd.f32 0.0, %v802
    %v804 = vpop.f32.mrb[0].mxu0
    %v805 = vpop.f32.mrb[0].mxu0
    %806 = vdwg.mxu0
    %v807 = vmul.f32 %v199, %v760
    %v808 = vmul.f32 %v201, %v762
    %v809 = vmul.f32 %v240, %v801
    %v810 = vmul.f32 %v242, %v803
    %v811 = vpack.c.bf16 %v807, %v807
    %v812 = vpack.c.bf16 %v808, %v808
    %v813 = vpack.c.bf16 %v809, %v809
    %v814 = vpack.c.bf16 %v810, %v810
    %v815 = vld [vmem:[%s1] sm:$0xf]
    %v816 = vld [vmem:[%s1 + $0x4] sm:$0xf]
    %v817 = vld [vmem:[%s1 + $0x8] sm:$0xf]
    %v818 = vld [vmem:[%s1 + $0xc] sm:$0xf]
    %v819 = vld [vmem:[%s2] sm:$0xf]
    %v820 = vld [vmem:[%s2 + $0x4] sm:$0xf]
    %v821 = vld [vmem:[%s2 + $0x8] sm:$0xf]
    %v822 = vld [vmem:[%s2 + $0xc] sm:$0xf]
    %v827 = vunpack.c.l.b16 %v819
    %v828 = vunpack.c.l.b16 %v820
    %v829 = vunpack.c.l.b16 %v821
    %v830 = vunpack.c.l.b16 %v822
    %v831 = vpack.c.b16 %v828, %v827
    %v832 = vpack.c.b16 %v830, %v829
    %v834 = vsel %vm523, %v831, 0
    %v837 = vsel %vm523, %v832, 0
    %vm839 = vcmask 1043456
    %v841 = vsel %vm839, %v811, 0
    %v844 = vsel %vm839, %v812, 0
    %v847 = vsel %vm839, %v813, 0
    %v850 = vsel %vm839, %v814, 0
    %852 = vmatprep.subr.bf16.mxu0 %v844
    %853 = vmatpush1.bf16.msra.mxu0 %v841
    %854 = vmatprep.subr.bf16.mxu0 0
    %855 = vmatpush1.bf16.msra.mxu0 0
    %856 = vmatprep.subr.bf16.mxu0 0
    %857 = vmatpush1.bf16.msra.mxu0 0
    %858 = vmatprep.subr.bf16.mxu0 0
    %859 = vmatpush1.bf16.msra.mxu0 0
    %860 = vmatprep.subr.bf16.mxu0 0
    %861 = vmatpush1.bf16.msra.mxu0 0
    %862 = vmatprep.subr.bf16.mxu0 0
    %863 = vmatpush1.bf16.msra.mxu0 0
    %864 = vmatprep.subr.bf16.mxu0 0
    %865 = vmatpush1.bf16.msra.mxu0 0
    %866 = vmatprep.subr.bf16.mxu0 0
    %867 = vmatpush1.bf16.msra.mxu0 0
    %868 = vmatprep.subr.bf16.mxu0 0
    %869 = vmatpush1.bf16.msra.mxu0 0
    %870 = vmatprep.subr.bf16.mxu0 0
    %871 = vmatpush1.bf16.msra.mxu0 0
    %872 = vmatprep.subr.bf16.mxu0 0
    %873 = vmatpush1.bf16.msra.mxu0 0
    %874 = vmatprep.subr.bf16.mxu0 0
    %875 = vmatpush1.bf16.msra.mxu0 0
    %876 = vmatprep.subr.bf16.mxu0 0
    %877 = vmatpush1.bf16.msra.mxu0 0
    %878 = vmatprep.subr.bf16.mxu0 0
    %879 = vmatpush1.bf16.msra.mxu0 0
    %880 = vmatprep.subr.bf16.mxu0 0
    %881 = vmatpush1.bf16.msra.mxu0 0
    %882 = vmatprep.subr.bf16.mxu0 0
    %883 = vmatpush1.bf16.msra.mxu0 0
    %884 = vmatprep.mubr.bf16.mxu0 0
    %885 = vmatmul.mubr.bf16.gmra.mrb[0].mxu0 %v834
    %v886 = vpop.f32.mrb[0].mxu0
    %v887 = vadd.f32 0.0, %v886
    %v888 = vpop.f32.mrb[0].mxu0
    %v889 = vadd.f32 0.0, %v888
    %v890 = vpop.f32.mrb[0].mxu0
    %v891 = vadd.f32 0.0, %v890
    %v892 = vpop.f32.mrb[0].mxu0
    %v893 = vadd.f32 0.0, %v892
    %894 = vmatprep.mubr.bf16.mxu0 0
    %895 = vmatmul.mubr.bf16.gmra.mrb[0].mxu0 %v837
    %v896 = vpop.f32.mrb[0].mxu0
    %v897 = vadd.f32 0.0, %v896
    %v898 = vpop.f32.mrb[0].mxu0
    %v899 = vadd.f32 0.0, %v898
    %v900 = vpop.f32.mrb[0].mxu0
    %v901 = vadd.f32 0.0, %v900
    %v902 = vpop.f32.mrb[0].mxu0
    %v903 = vadd.f32 0.0, %v902
    %904 = vdwg.mxu0
    %905 = vmatprep.subr.bf16.mxu0 %v850
    %906 = vmatpush1.bf16.msra.mxu0 %v847
    %907 = vmatprep.subr.bf16.mxu0 0
    %908 = vmatpush1.bf16.msra.mxu0 0
    %909 = vmatprep.subr.bf16.mxu0 0
    %910 = vmatpush1.bf16.msra.mxu0 0
    %911 = vmatprep.subr.bf16.mxu0 0
    %912 = vmatpush1.bf16.msra.mxu0 0
    %913 = vmatprep.subr.bf16.mxu0 0
    %914 = vmatpush1.bf16.msra.mxu0 0
    %915 = vmatprep.subr.bf16.mxu0 0
    %916 = vmatpush1.bf16.msra.mxu0 0
    %917 = vmatprep.subr.bf16.mxu0 0
    %918 = vmatpush1.bf16.msra.mxu0 0
    %919 = vmatprep.subr.bf16.mxu0 0
    %920 = vmatpush1.bf16.msra.mxu0 0
    %921 = vmatprep.subr.bf16.mxu0 0
    %922 = vmatpush1.bf16.msra.mxu0 0
    %923 = vmatprep.subr.bf16.mxu0 0
    %924 = vmatpush1.bf16.msra.mxu0 0
    %925 = vmatprep.subr.bf16.mxu0 0
    %926 = vmatpush1.bf16.msra.mxu0 0
    %927 = vmatprep.subr.bf16.mxu0 0
    %928 = vmatpush1.bf16.msra.mxu0 0
    %929 = vmatprep.subr.bf16.mxu0 0
    %930 = vmatpush1.bf16.msra.mxu0 0
    %931 = vmatprep.subr.bf16.mxu0 0
    %932 = vmatpush1.bf16.msra.mxu0 0
    %933 = vmatprep.subr.bf16.mxu0 0
    %934 = vmatpush1.bf16.msra.mxu0 0
    %935 = vmatprep.subr.bf16.mxu0 0
    %936 = vmatpush1.bf16.msra.mxu0 0
    %937 = vmatprep.mubr.bf16.mxu0 0
    %938 = vmatmul.mubr.bf16.gmra.mrb[0].mxu0 %v834
    %v939 = vpop.f32.mrb[0].mxu0
    %v940 = vadd.f32 0.0, %v939
    %v941 = vpop.f32.mrb[0].mxu0
    %v942 = vadd.f32 0.0, %v941
    %v943 = vpop.f32.mrb[0].mxu0
    %v944 = vadd.f32 0.0, %v943
    %v945 = vpop.f32.mrb[0].mxu0
    %v946 = vadd.f32 0.0, %v945
    %947 = vmatprep.mubr.bf16.mxu0 0
    %948 = vmatmul.mubr.bf16.gmra.mrb[0].mxu0 %v837
    %v949 = vpop.f32.mrb[0].mxu0
    %v950 = vadd.f32 0.0, %v949
    %v951 = vpop.f32.mrb[0].mxu0
    %v952 = vadd.f32 0.0, %v951
    %v953 = vpop.f32.mrb[0].mxu0
    %v954 = vadd.f32 0.0, %v953
    %v955 = vpop.f32.mrb[0].mxu0
    %v956 = vadd.f32 0.0, %v955
    %957 = vdwg.mxu0
    %v962 = vunpack.c.l.b16 %v815
    %v963 = vunpack.c.l.b16 %v816
    %v964 = vunpack.c.l.b16 %v817
    %v965 = vunpack.c.l.b16 %v818
    %v966 = vpack.c.b16 %v963, %v962
    %v967 = vpack.c.b16 %v965, %v964
    %v969 = vsel %vm160, %v966, 0
    %v972 = vsel %vm160, %v967, 0
    %974 = vmatprep.subr.bf16.mxu0 %v145
    %975 = vmatpush1.bf16.msra.mxu0 %v144
    %976 = vmatprep.subr.bf16.mxu0 %v149
    %977 = vmatpush1.bf16.msra.mxu0 %v148
    %978 = vmatprep.subr.bf16.mxu0 0
    %979 = vmatpush1.bf16.msra.mxu0 0
    %980 = vmatprep.subr.bf16.mxu0 0
    %981 = vmatpush1.bf16.msra.mxu0 0
    %982 = vmatprep.subr.bf16.mxu0 0
    %983 = vmatpush1.bf16.msra.mxu0 0
    %984 = vmatprep.subr.bf16.mxu0 0
    %985 = vmatpush1.bf16.msra.mxu0 0
    %986 = vmatprep.subr.bf16.mxu0 0
    %987 = vmatpush1.bf16.msra.mxu0 0
    %988 = vmatprep.subr.bf16.mxu0 0
    %989 = vmatpush1.bf16.msra.mxu0 0
    %990 = vmatprep.subr.bf16.mxu0 0
    %991 = vmatpush1.bf16.msra.mxu0 0
    %992 = vmatprep.subr.bf16.mxu0 0
    %993 = vmatpush1.bf16.msra.mxu0 0
    %994 = vmatprep.subr.bf16.mxu0 0
    %995 = vmatpush1.bf16.msra.mxu0 0
    %996 = vmatprep.subr.bf16.mxu0 0
    %997 = vmatpush1.bf16.msra.mxu0 0
    %998 = vmatprep.subr.bf16.mxu0 0
    %999 = vmatpush1.bf16.msra.mxu0 0
    %1000 = vmatprep.subr.bf16.mxu0 0
    %1001 = vmatpush1.bf16.msra.mxu0 0
    %1002 = vmatprep.subr.bf16.mxu0 0
    %1003 = vmatpush1.bf16.msra.mxu0 0
    %1004 = vmatprep.subr.bf16.mxu0 0
    %1005 = vmatpush1.bf16.msra.mxu0 0
    %1006 = vmatprep.mubr.bf16.mxu0 0
    %1007 = vmatmul.mubr.bf16.gmra.mrb[0].mxu0 %v969
    %v1008 = vpop.f32.mrb[0].mxu0
    %v1009 = vadd.f32 %v887, %v1008
    %v1010 = vpop.f32.mrb[0].mxu0
    %v1011 = vadd.f32 %v889, %v1010
    %v1012 = vpop.f32.mrb[0].mxu0
    %v1013 = vadd.f32 %v891, %v1012
    %v1014 = vpop.f32.mrb[0].mxu0
    %v1015 = vadd.f32 %v893, %v1014
    %1016 = vmatprep.mubr.bf16.mxu0 0
    %1017 = vmatmul.mubr.bf16.gmra.mrb[0].mxu0 %v972
    %v1018 = vpop.f32.mrb[0].mxu0
    %v1019 = vadd.f32 %v897, %v1018
    %v1020 = vpop.f32.mrb[0].mxu0
    %v1021 = vadd.f32 %v899, %v1020
    %v1022 = vpop.f32.mrb[0].mxu0
    %v1023 = vadd.f32 %v901, %v1022
    %v1024 = vpop.f32.mrb[0].mxu0
    %v1025 = vadd.f32 %v903, %v1024
    %1026 = vdwg.mxu0
    %1027 = vmatprep.subr.bf16.mxu0 %v147
    %1028 = vmatpush1.bf16.msra.mxu0 %v146
    %1029 = vmatprep.subr.bf16.mxu0 %v151
    %1030 = vmatpush1.bf16.msra.mxu0 %v150
    %1031 = vmatprep.subr.bf16.mxu0 0
    %1032 = vmatpush1.bf16.msra.mxu0 0
    %1033 = vmatprep.subr.bf16.mxu0 0
    %1034 = vmatpush1.bf16.msra.mxu0 0
    %1035 = vmatprep.subr.bf16.mxu0 0
    %1036 = vmatpush1.bf16.msra.mxu0 0
    %1037 = vmatprep.subr.bf16.mxu0 0
    %1038 = vmatpush1.bf16.msra.mxu0 0
    %1039 = vmatprep.subr.bf16.mxu0 0
    %1040 = vmatpush1.bf16.msra.mxu0 0
    %1041 = vmatprep.subr.bf16.mxu0 0
    %1042 = vmatpush1.bf16.msra.mxu0 0
    %1043 = vmatprep.subr.bf16.mxu0 0
    %1044 = vmatpush1.bf16.msra.mxu0 0
    %1045 = vmatprep.subr.bf16.mxu0 0
    %1046 = vmatpush1.bf16.msra.mxu0 0
    %1047 = vmatprep.subr.bf16.mxu0 0
    %1048 = vmatpush1.bf16.msra.mxu0 0
    %1049 = vmatprep.subr.bf16.mxu0 0
    %1050 = vmatpush1.bf16.msra.mxu0 0
    %1051 = vmatprep.subr.bf16.mxu0 0
    %1052 = vmatpush1.bf16.msra.mxu0 0
    %1053 = vmatprep.subr.bf16.mxu0 0
    %1054 = vmatpush1.bf16.msra.mxu0 0
    %1055 = vmatprep.subr.bf16.mxu0 0
    %1056 = vmatpush1.bf16.msra.mxu0 0
    %1057 = vmatprep.subr.bf16.mxu0 0
    %1058 = vmatpush1.bf16.msra.mxu0 0
    %1059 = vmatprep.mubr.bf16.mxu0 0
    %1060 = vmatmul.mubr.bf16.gmra.mrb[0].mxu0 %v969
    %v1061 = vpop.f32.mrb[0].mxu0
    %v1062 = vadd.f32 %v940, %v1061
    %v1063 = vpop.f32.mrb[0].mxu0
    %v1064 = vadd.f32 %v942, %v1063
    %v1065 = vpop.f32.mrb[0].mxu0
    %v1066 = vadd.f32 %v944, %v1065
    %v1067 = vpop.f32.mrb[0].mxu0
    %v1068 = vadd.f32 %v946, %v1067
    %1069 = vmatprep.mubr.bf16.mxu0 0
    %1070 = vmatmul.mubr.bf16.gmra.mrb[0].mxu0 %v972
    %v1071 = vpop.f32.mrb[0].mxu0
    %v1072 = vadd.f32 %v950, %v1071
    %v1073 = vpop.f32.mrb[0].mxu0
    %v1074 = vadd.f32 %v952, %v1073
    %v1075 = vpop.f32.mrb[0].mxu0
    %v1076 = vadd.f32 %v954, %v1075
    %v1077 = vpop.f32.mrb[0].mxu0
    %v1078 = vadd.f32 %v956, %v1077
    %1079 = vdwg.mxu0
    %v1080 = vld [vmem:[%s3] sm:$0xff]
    %v1081 = vld [vmem:[%s3 + $0x8] sm:$0xff]
    %v1082 = vld [vmem:[%s3 + $0x10] sm:$0xff]
    %v1083 = vld [vmem:[%s3 + $0x18] sm:$0xff]
    %1085 = vset.pattern.permute.xlu0 0
    %1086 = vperm.xlu0 %1085, %v1080
    %v1087 = vpop.permute.xlu0 %1086
    %1090 = vset.pattern.permute.xlu0 0
    %1091 = vperm.xlu0 %1090, %v1081
    %v1092 = vpop.permute.xlu0 %1091
    %1095 = vset.pattern.permute.xlu0 0
    %1096 = vperm.xlu0 %1095, %v1082
    %v1097 = vpop.permute.xlu0 %1096
    %1100 = vset.pattern.permute.xlu0 0
    %1101 = vperm.xlu0 %1100, %v1083
    %v1102 = vpop.permute.xlu0 %1101
    %v1104 = vadd.f32 %v1009, %v1087
    %v1105 = vadd.f32 %v1011, %v1087
    %v1106 = vadd.f32 %v1062, %v1087
    %v1107 = vadd.f32 %v1064, %v1087
    %v1108 = vadd.f32 %v1013, %v1092
    %v1109 = vadd.f32 %v1015, %v1092
    %v1110 = vadd.f32 %v1066, %v1092
    %v1111 = vadd.f32 %v1068, %v1092
    %v1112 = vadd.f32 %v1019, %v1097
    %v1113 = vadd.f32 %v1021, %v1097
    %v1114 = vadd.f32 %v1072, %v1097
    %v1115 = vadd.f32 %v1074, %v1097
    %v1116 = vadd.f32 %v1023, %v1102
    %v1117 = vadd.f32 %v1025, %v1102
    %v1118 = vadd.f32 %v1076, %v1102
    %v1119 = vadd.f32 %v1078, %v1102
    %v1120 = vmax.f32 %v1104, 0.0
    %v1121 = vmax.f32 %v1105, 0.0
    %v1122 = vmax.f32 %v1106, 0.0
    %v1123 = vmax.f32 %v1107, 0.0
    %v1124 = vmax.f32 %v1108, 0.0
    %v1125 = vmax.f32 %v1109, 0.0
    %v1126 = vmax.f32 %v1110, 0.0
    %v1127 = vmax.f32 %v1111, 0.0
    %v1128 = vmax.f32 %v1112, 0.0
    %v1129 = vmax.f32 %v1113, 0.0
    %v1130 = vmax.f32 %v1114, 0.0
    %v1131 = vmax.f32 %v1115, 0.0
    %v1132 = vmax.f32 %v1116, 0.0
    %v1133 = vmax.f32 %v1117, 0.0
    %v1134 = vmax.f32 %v1118, 0.0
    %v1135 = vmax.f32 %v1119, 0.0
    %v1136 = vld [vmem:[%s4] sm:$0xf]
    %v1137 = vld [vmem:[%s4 + $0x4] sm:$0xf]
    %v1138 = vld [vmem:[%s4 + $0x8] sm:$0xf]
    %v1139 = vld [vmem:[%s4 + $0xc] sm:$0xf]
    %v1140 = vpack.c.bf16 %v1124, %v1120
    %v1141 = vpack.c.bf16 %v1125, %v1121
    %v1142 = vpack.c.bf16 %v1126, %v1122
    %v1143 = vpack.c.bf16 %v1127, %v1123
    %v1144 = vpack.c.bf16 %v1132, %v1128
    %v1145 = vpack.c.bf16 %v1133, %v1129
    %v1146 = vpack.c.bf16 %v1134, %v1130
    %v1147 = vpack.c.bf16 %v1135, %v1131
    %v1148 = vld [vmem:[%s5] sm:$0xff]
    %v1149 = vld [vmem:[%s5 + $0x8] sm:$0xff]
    %v1150 = vld [vmem:[%s5 + $0x10] sm:$0xff]
    %v1151 = vld [vmem:[%s5 + $0x18] sm:$0xff]
    %1153 = vset.pattern.permute.xlu0 0
    %1154 = vperm.xlu0 %1153, %v1148
    %v1155 = vpop.permute.xlu0 %1154
    %1158 = vset.pattern.permute.xlu0 0
    %1159 = vperm.xlu0 %1158, %v1149
    %v1160 = vpop.permute.xlu0 %1159
    %1163 = vset.pattern.permute.xlu0 0
    %1164 = vperm.xlu0 %1163, %v1150
    %v1165 = vpop.permute.xlu0 %1164
    %1168 = vset.pattern.permute.xlu0 0
    %1169 = vperm.xlu0 %1168, %v1151
    %v1170 = vpop.permute.xlu0 %1169
    %v1176 = vunpack.c.l.b16 %v1136
    %v1177 = vunpack.c.l.b16 %v1137
    %v1178 = vunpack.c.l.b16 %v1138
    %v1179 = vunpack.c.l.b16 %v1139
    %v1180 = vpack.c.b16 %v1177, %v1176
    %v1181 = vpack.c.b16 %v1179, %v1178
    %v1183 = vsel %vm160, %v1180, 0
    %v1186 = vsel %vm160, %v1181, 0
    %1188 = vmatprep.subr.bf16.mxu0 %v1141
    %1189 = vmatpush1.bf16.msra.mxu0 %v1140
    %1190 = vmatprep.subr.bf16.mxu0 %v1145
    %1191 = vmatpush1.bf16.msra.mxu0 %v1144
    %1192 = vmatprep.subr.bf16.mxu0 0
    %1193 = vmatpush1.bf16.msra.mxu0 0
    %1194 = vmatprep.subr.bf16.mxu0 0
    %1195 = vmatpush1.bf16.msra.mxu0 0
    %1196 = vmatprep.subr.bf16.mxu0 0
    %1197 = vmatpush1.bf16.msra.mxu0 0
    %1198 = vmatprep.subr.bf16.mxu0 0
    %1199 = vmatpush1.bf16.msra.mxu0 0
    %1200 = vmatprep.subr.bf16.mxu0 0
    %1201 = vmatpush1.bf16.msra.mxu0 0
    %1202 = vmatprep.subr.bf16.mxu0 0
    %1203 = vmatpush1.bf16.msra.mxu0 0
    %1204 = vmatprep.subr.bf16.mxu0 0
    %1205 = vmatpush1.bf16.msra.mxu0 0
    %1206 = vmatprep.subr.bf16.mxu0 0
    %1207 = vmatpush1.bf16.msra.mxu0 0
    %1208 = vmatprep.subr.bf16.mxu0 0
    %1209 = vmatpush1.bf16.msra.mxu0 0
    %1210 = vmatprep.subr.bf16.mxu0 0
    %1211 = vmatpush1.bf16.msra.mxu0 0
    %1212 = vmatprep.subr.bf16.mxu0 0
    %1213 = vmatpush1.bf16.msra.mxu0 0
    %1214 = vmatprep.subr.bf16.mxu0 0
    %1215 = vmatpush1.bf16.msra.mxu0 0
    %1216 = vmatprep.subr.bf16.mxu0 0
    %1217 = vmatpush1.bf16.msra.mxu0 0
    %1218 = vmatprep.subr.bf16.mxu0 0
    %1219 = vmatpush1.bf16.msra.mxu0 0
    %1220 = vmatprep.mubr.bf16.mxu0 0
    %1221 = vmatmul.mubr.bf16.gmra.mrb[0].mxu0 %v1183
    %v1222 = vpop.f32.mrb[0].mxu0
    %v1223 = vadd.f32 %v1155, %v1222
    %v1224 = vpop.f32.mrb[0].mxu0
    %v1225 = vadd.f32 %v1155, %v1224
    %v1226 = vpop.f32.mrb[0].mxu0
    %v1227 = vadd.f32 %v1160, %v1226
    %v1228 = vpop.f32.mrb[0].mxu0
    %v1229 = vadd.f32 %v1160, %v1228
    %1230 = vmatprep.mubr.bf16.mxu0 0
    %1231 = vmatmul.mubr.bf16.gmra.mrb[0].mxu0 %v1186
    %v1232 = vpop.f32.mrb[0].mxu0
    %v1233 = vadd.f32 %v1165, %v1232
    %v1234 = vpop.f32.mrb[0].mxu0
    %v1235 = vadd.f32 %v1165, %v1234
    %v1236 = vpop.f32.mrb[0].mxu0
    %v1237 = vadd.f32 %v1170, %v1236
    %v1238 = vpop.f32.mrb[0].mxu0
    %v1239 = vadd.f32 %v1170, %v1238
    %1240 = vdwg.mxu0
    %1241 = vmatprep.subr.bf16.mxu0 %v1143
    %1242 = vmatpush1.bf16.msra.mxu0 %v1142
    %1243 = vmatprep.subr.bf16.mxu0 %v1147
    %1244 = vmatpush1.bf16.msra.mxu0 %v1146
    %1245 = vmatprep.subr.bf16.mxu0 0
    %1246 = vmatpush1.bf16.msra.mxu0 0
    %1247 = vmatprep.subr.bf16.mxu0 0
    %1248 = vmatpush1.bf16.msra.mxu0 0
    %1249 = vmatprep.subr.bf16.mxu0 0
    %1250 = vmatpush1.bf16.msra.mxu0 0
    %1251 = vmatprep.subr.bf16.mxu0 0
    %1252 = vmatpush1.bf16.msra.mxu0 0
    %1253 = vmatprep.subr.bf16.mxu0 0
    %1254 = vmatpush1.bf16.msra.mxu0 0
    %1255 = vmatprep.subr.bf16.mxu0 0
    %1256 = vmatpush1.bf16.msra.mxu0 0
    %1257 = vmatprep.subr.bf16.mxu0 0
    %1258 = vmatpush1.bf16.msra.mxu0 0
    %1259 = vmatprep.subr.bf16.mxu0 0
    %1260 = vmatpush1.bf16.msra.mxu0 0
    %1261 = vmatprep.subr.bf16.mxu0 0
    %1262 = vmatpush1.bf16.msra.mxu0 0
    %1263 = vmatprep.subr.bf16.mxu0 0
    %1264 = vmatpush1.bf16.msra.mxu0 0
    %1265 = vmatprep.subr.bf16.mxu0 0
    %1266 = vmatpush1.bf16.msra.mxu0 0
    %1267 = vmatprep.subr.bf16.mxu0 0
    %1268 = vmatpush1.bf16.msra.mxu0 0
    %1269 = vmatprep.subr.bf16.mxu0 0
    %1270 = vmatpush1.bf16.msra.mxu0 0
    %1271 = vmatprep.subr.bf16.mxu0 0
    %1272 = vmatpush1.bf16.msra.mxu0 0
    %1273 = vmatprep.mubr.bf16.mxu0 0
    %1274 = vmatmul.mubr.bf16.gmra.mrb[0].mxu0 %v1183
    %v1275 = vpop.f32.mrb[0].mxu0
    %v1276 = vadd.f32 %v1155, %v1275
    %v1277 = vpop.f32.mrb[0].mxu0
    %v1278 = vadd.f32 %v1155, %v1277
    %v1279 = vpop.f32.mrb[0].mxu0
    %v1280 = vadd.f32 %v1160, %v1279
    %v1281 = vpop.f32.mrb[0].mxu0
    %v1282 = vadd.f32 %v1160, %v1281
    %1283 = vmatprep.mubr.bf16.mxu0 0
    %1284 = vmatmul.mubr.bf16.gmra.mrb[0].mxu0 %v1186
    %v1285 = vpop.f32.mrb[0].mxu0
    %v1286 = vadd.f32 %v1165, %v1285
    %v1287 = vpop.f32.mrb[0].mxu0
    %v1288 = vadd.f32 %v1165, %v1287
    %v1289 = vpop.f32.mrb[0].mxu0
    %v1290 = vadd.f32 %v1170, %v1289
    %v1291 = vpop.f32.mrb[0].mxu0
    %v1292 = vadd.f32 %v1170, %v1291
    %1293 = vdwg.mxu0
    %v1294 = vunpack.c.l.bf16 %v46
    %v1295 = vunpack.c.h.bf16 %v46
    %v1296 = vunpack.c.l.bf16 %v47
    %v1297 = vunpack.c.h.bf16 %v47
    %v1298 = vunpack.c.l.bf16 %v48
    %v1299 = vunpack.c.h.bf16 %v48
    %v1300 = vunpack.c.l.bf16 %v49
    %v1301 = vunpack.c.h.bf16 %v49
    %v1302 = vunpack.c.l.bf16 %v50
    %v1303 = vunpack.c.h.bf16 %v50
    %v1304 = vunpack.c.l.bf16 %v51
    %v1305 = vunpack.c.h.bf16 %v51
    %v1306 = vunpack.c.l.bf16 %v52
    %v1307 = vunpack.c.h.bf16 %v52
    %v1308 = vunpack.c.l.bf16 %v53
    %v1309 = vunpack.c.h.bf16 %v53
    %v1310 = vadd.f32 %v1223, %v1294
    %v1311 = vadd.f32 %v1225, %v1295
    %v1312 = vadd.f32 %v1276, %v1296
    %v1313 = vadd.f32 %v1278, %v1297
    %v1314 = vadd.f32 %v1227, %v1298
    %v1315 = vadd.f32 %v1229, %v1299
    %v1316 = vadd.f32 %v1280, %v1300
    %v1317 = vadd.f32 %v1282, %v1301
    %v1318 = vadd.f32 %v1233, %v1302
    %v1319 = vadd.f32 %v1235, %v1303
    %v1320 = vadd.f32 %v1286, %v1304
    %v1321 = vadd.f32 %v1288, %v1305
    %v1322 = vadd.f32 %v1237, %v1306
    %v1323 = vadd.f32 %v1239, %v1307
    %v1324 = vadd.f32 %v1290, %v1308
    %v1325 = vadd.f32 %v1292, %v1309
    %v1326 = vpack.c.bf16 %v1314, %v1310
    %v1327 = vpack.c.bf16 %v1315, %v1311
    %v1328 = vpack.c.bf16 %v1316, %v1312
    %v1329 = vpack.c.bf16 %v1317, %v1313
    %v1330 = vpack.c.bf16 %v1322, %v1318
    %v1331 = vpack.c.bf16 %v1323, %v1319
    %v1332 = vpack.c.bf16 %v1324, %v1320
    %v1333 = vpack.c.bf16 %v1325, %v1321
    %1334 = vmatprep.subr.bf16.mxu0 0
    %1335 = vmatpush1.bf16.msra.mxu0 %v378
    %1336 = vmatprep.subr.bf16.mxu0 0
    %1337 = vmatpush1.bf16.msra.mxu0 %v379
    %1338 = vmatprep.subr.bf16.mxu0 0
    %1339 = vmatpush1.bf16.msra.mxu0 %v380
    %1340 = vmatprep.subr.bf16.mxu0 0
    %1341 = vmatpush1.bf16.msra.mxu0 %v381
    %1342 = vmatprep.subr.bf16.mxu0 0
    %1343 = vmatpush1.bf16.msra.mxu0 %v382
    %1344 = vmatprep.subr.bf16.mxu0 0
    %1345 = vmatpush1.bf16.msra.mxu0 %v383
    %1346 = vmatprep.subr.bf16.mxu0 0
    %1347 = vmatpush1.bf16.msra.mxu0 %v384
    %1348 = vmatprep.subr.bf16.mxu0 0
    %1349 = vmatpush1.bf16.msra.mxu0 %v385
    %1350 = vmatprep.subr.bf16.mxu0 0
    %1351 = vmatpush1.bf16.msra.mxu0 %v386
    %1352 = vmatprep.subr.bf16.mxu0 0
    %1353 = vmatpush1.bf16.msra.mxu0 %v387
    %1354 = vmatprep.subr.bf16.mxu0 0
    %1355 = vmatpush1.bf16.msra.mxu0 %v388
    %1356 = vmatprep.subr.bf16.mxu0 0
    %1357 = vmatpush1.bf16.msra.mxu0 %v389
    %1358 = vmatprep.subr.bf16.mxu0 0
    %1359 = vmatpush1.bf16.msra.mxu0 %v390
    %1360 = vmatprep.subr.bf16.mxu0 0
    %1361 = vmatpush1.bf16.msra.mxu0 %v391
    %1362 = vmatprep.subr.bf16.mxu0 0
    %1363 = vmatpush1.bf16.msra.mxu0 %v392
    %1364 = vmatprep.subr.bf16.mxu0 0
    %1365 = vmatpush1.bf16.msra.mxu0 %v393
    %1366 = vmatprep.mubr.bf16.mxu0 %v1327
    %1367 = vmatmul.mubr.bf16.gmra.mrb[0].mxu0 %v1326
    %v1368 = vpop.f32.mrb[0].mxu0
    %v1369 = vadd.f32 0.0, %v1368
    %v1370 = vpop.f32.mrb[0].mxu0
    %v1371 = vpop.f32.mrb[0].mxu0
    %v1372 = vadd.f32 0.0, %v1371
    %v1373 = vpop.f32.mrb[0].mxu0
    %1374 = vmatprep.mubr.bf16.mxu0 %v1331
    %1375 = vmatmul.mubr.bf16.gmra.mrb[0].mxu0 %v1330
    %v1376 = vpop.f32.mrb[0].mxu0
    %v1377 = vadd.f32 0.0, %v1376
    %v1378 = vpop.f32.mrb[0].mxu0
    %v1379 = vpop.f32.mrb[0].mxu0
    %v1380 = vadd.f32 0.0, %v1379
    %v1381 = vpop.f32.mrb[0].mxu0
    %1382 = vdwg.mxu0
    %1383 = vmatprep.subr.bf16.mxu0 0
    %1384 = vmatpush1.bf16.msra.mxu0 %v394
    %1385 = vmatprep.subr.bf16.mxu0 0
    %1386 = vmatpush1.bf16.msra.mxu0 %v395
    %1387 = vmatprep.subr.bf16.mxu0 0
    %1388 = vmatpush1.bf16.msra.mxu0 %v396
    %1389 = vmatprep.subr.bf16.mxu0 0
    %1390 = vmatpush1.bf16.msra.mxu0 %v397
    %1391 = vmatprep.subr.bf16.mxu0 0
    %1392 = vmatpush1.bf16.msra.mxu0 %v398
    %1393 = vmatprep.subr.bf16.mxu0 0
    %1394 = vmatpush1.bf16.msra.mxu0 %v399
    %1395 = vmatprep.subr.bf16.mxu0 0
    %1396 = vmatpush1.bf16.msra.mxu0 %v400
    %1397 = vmatprep.subr.bf16.mxu0 0
    %1398 = vmatpush1.bf16.msra.mxu0 %v401
    %1399 = vmatprep.subr.bf16.mxu0 0
    %1400 = vmatpush1.bf16.msra.mxu0 %v402
    %1401 = vmatprep.subr.bf16.mxu0 0
    %1402 = vmatpush1.bf16.msra.mxu0 %v403
    %1403 = vmatprep.subr.bf16.mxu0 0
    %1404 = vmatpush1.bf16.msra.mxu0 %v404
    %1405 = vmatprep.subr.bf16.mxu0 0
    %1406 = vmatpush1.bf16.msra.mxu0 %v405
    %1407 = vmatprep.subr.bf16.mxu0 0
    %1408 = vmatpush1.bf16.msra.mxu0 %v406
    %1409 = vmatprep.subr.bf16.mxu0 0
    %1410 = vmatpush1.bf16.msra.mxu0 %v407
    %1411 = vmatprep.subr.bf16.mxu0 0
    %1412 = vmatpush1.bf16.msra.mxu0 %v408
    %1413 = vmatprep.subr.bf16.mxu0 0
    %1414 = vmatpush1.bf16.msra.mxu0 %v409
    %1415 = vmatprep.mubr.bf16.mxu0 %v1329
    %1416 = vmatmul.mubr.bf16.gmra.mrb[0].mxu0 %v1328
    %v1417 = vpop.f32.mrb[0].mxu0
    %v1418 = vadd.f32 %v1369, %v1417
    %v1419 = vpop.f32.mrb[0].mxu0
    %v1420 = vpop.f32.mrb[0].mxu0
    %v1421 = vadd.f32 %v1372, %v1420
    %v1422 = vpop.f32.mrb[0].mxu0
    %1423 = vmatprep.mubr.bf16.mxu0 %v1333
    %1424 = vmatmul.mubr.bf16.gmra.mrb[0].mxu0 %v1332
    %v1425 = vpop.f32.mrb[0].mxu0
    %v1426 = vadd.f32 %v1377, %v1425
    %v1427 = vpop.f32.mrb[0].mxu0
    %v1428 = vpop.f32.mrb[0].mxu0
    %v1429 = vadd.f32 %v1380, %v1428
    %v1430 = vpop.f32.mrb[0].mxu0
    %1431 = vdwg.mxu0
    %v1432 = vld [vmem:[%s8] sm:$0xf]
    %v1434 = vsel %vm160, %v1432, 0
    %1436 = vmatprep.subr.mxu0 0.0
    %1437 = vmatpush1.msra.mxu0 %v1418
    %1438 = vmatprep.subr.mxu0 0.0
    %1439 = vmatpush1.msra.mxu0 %v1421
    %1440 = vmatprep.subr.mxu0 0.0
    %1441 = vmatpush1.msra.mxu0 %v1426
    %1442 = vmatprep.subr.mxu0 0.0
    %1443 = vmatpush1.msra.mxu0 %v1429
    %1444 = vmatprep.subr.mxu0 0.0
    %1445 = vmatpush1.msra.mxu0 0.0
    %1446 = vmatprep.subr.mxu0 0.0
    %1447 = vmatpush1.msra.mxu0 0.0
    %1448 = vmatprep.subr.mxu0 0.0
    %1449 = vmatpush1.msra.mxu0 0.0
    %1450 = vmatprep.subr.mxu0 0.0
    %1451 = vmatpush1.msra.mxu0 0.0
    %1452 = vmatprep.subr.mxu0 0.0
    %1453 = vmatpush1.msra.mxu0 0.0
    %1454 = vmatprep.subr.mxu0 0.0
    %1455 = vmatpush1.msra.mxu0 0.0
    %1456 = vmatprep.subr.mxu0 0.0
    %1457 = vmatpush1.msra.mxu0 0.0
    %1458 = vmatprep.subr.mxu0 0.0
    %1459 = vmatpush1.msra.mxu0 0.0
    %1460 = vmatprep.subr.mxu0 0.0
    %1461 = vmatpush1.msra.mxu0 0.0
    %1462 = vmatprep.subr.mxu0 0.0
    %1463 = vmatpush1.msra.mxu0 0.0
    %1464 = vmatprep.subr.mxu0 0.0
    %1465 = vmatpush1.msra.mxu0 0.0
    %1466 = vmatprep.subr.mxu0 0.0
    %1467 = vmatpush1.msra.mxu0 0.0
    %1468 = vmatprep.subr.mxu0 0.0
    %1469 = vmatpush1.msra.mxu0 0.0
    %1470 = vmatprep.subr.mxu0 0.0
    %1471 = vmatpush1.msra.mxu0 0.0
    %1472 = vmatprep.subr.mxu0 0.0
    %1473 = vmatpush1.msra.mxu0 0.0
    %1474 = vmatprep.subr.mxu0 0.0
    %1475 = vmatpush1.msra.mxu0 0.0
    %1476 = vmatprep.subr.mxu0 0.0
    %1477 = vmatpush1.msra.mxu0 0.0
    %1478 = vmatprep.subr.mxu0 0.0
    %1479 = vmatpush1.msra.mxu0 0.0
    %1480 = vmatprep.subr.mxu0 0.0
    %1481 = vmatpush1.msra.mxu0 0.0
    %1482 = vmatprep.subr.mxu0 0.0
    %1483 = vmatpush1.msra.mxu0 0.0
    %1484 = vmatprep.subr.mxu0 0.0
    %1485 = vmatpush1.msra.mxu0 0.0
    %1486 = vmatprep.subr.mxu0 0.0
    %1487 = vmatpush1.msra.mxu0 0.0
    %1488 = vmatprep.subr.mxu0 0.0
    %1489 = vmatpush1.msra.mxu0 0.0
    %1490 = vmatprep.subr.mxu0 0.0
    %1491 = vmatpush1.msra.mxu0 0.0
    %1492 = vmatprep.subr.mxu0 0.0
    %1493 = vmatpush1.msra.mxu0 0.0
    %1494 = vmatprep.subr.mxu0 0.0
    %1495 = vmatpush1.msra.mxu0 0.0
    %1496 = vmatprep.subr.mxu0 0.0
    %1497 = vmatpush1.msra.mxu0 0.0
    %1498 = vmatprep.subr.mxu0 0.0
    %1499 = vmatpush1.msra.mxu0 0.0
    %1500 = vmatprep.mubr.f32.mxu0 0.0
    %1501 = vmatmul.mubr.f32.gmra.mrb[0].mxu0 %v1434
    %v1502 = vpop.f32.mrb[0].mxu0
    %v1503 = vadd.f32 0.0, %v1502
    %v1504 = vpop.f32.mrb[0].mxu0
    %1505 = vdwg.mxu0
    %v1506 = vmax.f32 %v1503, 0.0
    %v1507 = vld [vmem:[%s9] sm:$0xff]
    %v1508 = vld [vmem:[%s9 + $0x8] sm:$0xff]
    %v1509 = vld [vmem:[%s9 + $0x10] sm:$0xff]
    %v1510 = vld [vmem:[%s9 + $0x18] sm:$0xff]
    %vm1511 = vcmask 31744
    %v1513 = vsel %vm1511, %v1507, 0
    %v1516 = vsel %vm1511, %v1508, 0
    %v1519 = vsel %vm1511, %v1509, 0
    %v1522 = vsel %vm1511, %v1510, 0
    %v1525 = vsel %vm839, %v1506, 0
    %1527 = vmatprep.subr.mxu0 0.0
    %1528 = vmatpush1.msra.mxu0 %v1525
    %1529 = vmatprep.subr.mxu0 0.0
    %1530 = vmatpush1.msra.mxu0 0.0
    %1531 = vmatprep.subr.mxu0 0.0
    %1532 = vmatpush1.msra.mxu0 0.0
    %1533 = vmatprep.subr.mxu0 0.0
    %1534 = vmatpush1.msra.mxu0 0.0
    %1535 = vmatprep.subr.mxu0 0.0
    %1536 = vmatpush1.msra.mxu0 0.0
    %1537 = vmatprep.subr.mxu0 0.0
    %1538 = vmatpush1.msra.mxu0 0.0
    %1539 = vmatprep.subr.mxu0 0.0
    %1540 = vmatpush1.msra.mxu0 0.0
    %1541 = vmatprep.subr.mxu0 0.0
    %1542 = vmatpush1.msra.mxu0 0.0
    %1543 = vmatprep.subr.mxu0 0.0
    %1544 = vmatpush1.msra.mxu0 0.0
    %1545 = vmatprep.subr.mxu0 0.0
    %1546 = vmatpush1.msra.mxu0 0.0
    %1547 = vmatprep.subr.mxu0 0.0
    %1548 = vmatpush1.msra.mxu0 0.0
    %1549 = vmatprep.subr.mxu0 0.0
    %1550 = vmatpush1.msra.mxu0 0.0
    %1551 = vmatprep.subr.mxu0 0.0
    %1552 = vmatpush1.msra.mxu0 0.0
    %1553 = vmatprep.subr.mxu0 0.0
    %1554 = vmatpush1.msra.mxu0 0.0
    %1555 = vmatprep.subr.mxu0 0.0
    %1556 = vmatpush1.msra.mxu0 0.0
    %1557 = vmatprep.subr.mxu0 0.0
    %1558 = vmatpush1.msra.mxu0 0.0
    %1559 = vmatprep.subr.mxu0 0.0
    %1560 = vmatpush1.msra.mxu0 0.0
    %1561 = vmatprep.subr.mxu0 0.0
    %1562 = vmatpush1.msra.mxu0 0.0
    %1563 = vmatprep.subr.mxu0 0.0
    %1564 = vmatpush1.msra.mxu0 0.0
    %1565 = vmatprep.subr.mxu0 0.0
    %1566 = vmatpush1.msra.mxu0 0.0
    %1567 = vmatprep.subr.mxu0 0.0
    %1568 = vmatpush1.msra.mxu0 0.0
    %1569 = vmatprep.subr.mxu0 0.0
    %1570 = vmatpush1.msra.mxu0 0.0
    %1571 = vmatprep.subr.mxu0 0.0
    %1572 = vmatpush1.msra.mxu0 0.0
    %1573 = vmatprep.subr.mxu0 0.0
    %1574 = vmatpush1.msra.mxu0 0.0
    %1575 = vmatprep.subr.mxu0 0.0
    %1576 = vmatpush1.msra.mxu0 0.0
    %1577 = vmatprep.subr.mxu0 0.0
    %1578 = vmatpush1.msra.mxu0 0.0
    %1579 = vmatprep.subr.mxu0 0.0
    %1580 = vmatpush1.msra.mxu0 0.0
    %1581 = vmatprep.subr.mxu0 0.0
    %1582 = vmatpush1.msra.mxu0 0.0
    %1583 = vmatprep.subr.mxu0 0.0
    %1584 = vmatpush1.msra.mxu0 0.0
    %1585 = vmatprep.subr.mxu0 0.0
    %1586 = vmatpush1.msra.mxu0 0.0
    %1587 = vmatprep.subr.mxu0 0.0
    %1588 = vmatpush1.msra.mxu0 0.0
    %1589 = vmatprep.subr.mxu0 0.0
    %1590 = vmatpush1.msra.mxu0 0.0
    %1591 = vmatprep.mubr.f32.mxu0 0.0
    %1592 = vmatmul.mubr.f32.gmra.mrb[0].mxu0 %v1513
    %v1593 = vpop.f32.mrb[0].mxu0
    %v1594 = vadd.f32 0.0, %v1593
    %v1595 = vpop.f32.mrb[0].mxu0
    %1596 = vmatprep.mubr.f32.mxu0 0.0
    %1597 = vmatmul.mubr.f32.gmra.mrb[0].mxu0 %v1516
    %v1598 = vpop.f32.mrb[0].mxu0
    %v1599 = vadd.f32 0.0, %v1598
    %v1600 = vpop.f32.mrb[0].mxu0
    %1601 = vmatprep.mubr.f32.mxu0 0.0
    %1602 = vmatmul.mubr.f32.gmra.mrb[0].mxu0 %v1519
    %v1603 = vpop.f32.mrb[0].mxu0
    %v1604 = vadd.f32 0.0, %v1603
    %v1605 = vpop.f32.mrb[0].mxu0
    %1606 = vmatprep.mubr.f32.mxu0 0.0
    %1607 = vmatmul.mubr.f32.gmra.mrb[0].mxu0 %v1522
    %v1608 = vpop.f32.mrb[0].mxu0
    %v1609 = vadd.f32 0.0, %v1608
    %v1610 = vpop.f32.mrb[0].mxu0
    %1611 = vdwg.mxu0
    %v1612 = vxor.u32 %v1594, 2147483648
    %v1613 = vxor.u32 %v1599, 2147483648
    %v1614 = vxor.u32 %v1604, 2147483648
    %v1615 = vxor.u32 %v1609, 2147483648
    %v1616 = vmul.f32 %v1612, 1.442695
    %v1617 = vpow.pop %v1616
    %v1618 = vmul.f32 %v1613, 1.442695
    %v1619 = vpow.pop %v1618
    %v1620 = vmul.f32 %v1614, 1.442695
    %v1621 = vpow.pop %v1620
    %v1622 = vmul.f32 %v1615, 1.442695
    %v1623 = vpow.pop %v1622
    %v1624 = vadd.f32 %v1617, 1.0
    %v1625 = vadd.f32 %v1619, 1.0
    %v1626 = vadd.f32 %v1621, 1.0
    %v1627 = vadd.f32 %v1623, 1.0
    %v1628 = vrcp.pop %v1624
    %v1629 = vmul.f32 1.0, %v1628
    %v1630 = vrcp.pop %v1625
    %v1631 = vmul.f32 1.0, %v1630
    %v1632 = vrcp.pop %v1626
    %v1633 = vmul.f32 1.0, %v1632
    %v1634 = vrcp.pop %v1627
    %v1635 = vmul.f32 1.0, %v1634
    %v1636 = vpack.c.bf16 %v1631, %v1629
    %v1637 = vpack.c.bf16 %v1635, %v1633
    %v1639 = vsel %vm709, %v1636, 0
    %v1642 = vsel %vm709, %v1637, 0
    %1644 = vmatprep.subr.bf16.mxu0 %v717
    %1645 = vmatpush1.bf16.msra.mxu0 %v714
    %1646 = vmatprep.subr.bf16.mxu0 0
    %1647 = vmatpush1.bf16.msra.mxu0 0
    %1648 = vmatprep.subr.bf16.mxu0 0
    %1649 = vmatpush1.bf16.msra.mxu0 0
    %1650 = vmatprep.subr.bf16.mxu0 0
    %1651 = vmatpush1.bf16.msra.mxu0 0
    %1652 = vmatprep.subr.bf16.mxu0 0
    %1653 = vmatpush1.bf16.msra.mxu0 0
    %1654 = vmatprep.subr.bf16.mxu0 0
    %1655 = vmatpush1.bf16.msra.mxu0 0
    %1656 = vmatprep.subr.bf16.mxu0 0
    %1657 = vmatpush1.bf16.msra.mxu0 0
    %1658 = vmatprep.subr.bf16.mxu0 0
    %1659 = vmatpush1.bf16.msra.mxu0 0
    %1660 = vmatprep.subr.bf16.mxu0 0
    %1661 = vmatpush1.bf16.msra.mxu0 0
    %1662 = vmatprep.subr.bf16.mxu0 0
    %1663 = vmatpush1.bf16.msra.mxu0 0
    %1664 = vmatprep.subr.bf16.mxu0 0
    %1665 = vmatpush1.bf16.msra.mxu0 0
    %1666 = vmatprep.subr.bf16.mxu0 0
    %1667 = vmatpush1.bf16.msra.mxu0 0
    %1668 = vmatprep.subr.bf16.mxu0 0
    %1669 = vmatpush1.bf16.msra.mxu0 0
    %1670 = vmatprep.subr.bf16.mxu0 0
    %1671 = vmatpush1.bf16.msra.mxu0 0
    %1672 = vmatprep.subr.bf16.mxu0 0
    %1673 = vmatpush1.bf16.msra.mxu0 0
    %1674 = vmatprep.subr.bf16.mxu0 0
    %1675 = vmatpush1.bf16.msra.mxu0 0
    %1676 = vmatprep.mubr.bf16.mxu0 0
    %1677 = vmatmul.mubr.bf16.gmra.mrb[0].mxu0 %v1639
    %v1678 = vpop.f32.mrb[0].mxu0
    %v1679 = vadd.f32 0.0, %v1678
    %v1680 = vpop.f32.mrb[0].mxu0
    %v1681 = vadd.f32 0.0, %v1680
    %v1682 = vpop.f32.mrb[0].mxu0
    %v1683 = vadd.f32 0.0, %v1682
    %v1684 = vpop.f32.mrb[0].mxu0
    %v1685 = vadd.f32 0.0, %v1684
    %1686 = vmatprep.mubr.bf16.mxu0 0
    %1687 = vmatmul.mubr.bf16.gmra.mrb[0].mxu0 %v1642
    %v1688 = vpop.f32.mrb[0].mxu0
    %v1689 = vadd.f32 0.0, %v1688
    %v1690 = vpop.f32.mrb[0].mxu0
    %v1691 = vadd.f32 0.0, %v1690
    %v1692 = vpop.f32.mrb[0].mxu0
    %v1693 = vadd.f32 0.0, %v1692
    %v1694 = vpop.f32.mrb[0].mxu0
    %v1695 = vadd.f32 0.0, %v1694
    %1696 = vdwg.mxu0
    %1697 = vmatprep.subr.bf16.mxu0 %v723
    %1698 = vmatpush1.bf16.msra.mxu0 %v720
    %1699 = vmatprep.subr.bf16.mxu0 0
    %1700 = vmatpush1.bf16.msra.mxu0 0
    %1701 = vmatprep.subr.bf16.mxu0 0
    %1702 = vmatpush1.bf16.msra.mxu0 0
    %1703 = vmatprep.subr.bf16.mxu0 0
    %1704 = vmatpush1.bf16.msra.mxu0 0
    %1705 = vmatprep.subr.bf16.mxu0 0
    %1706 = vmatpush1.bf16.msra.mxu0 0
    %1707 = vmatprep.subr.bf16.mxu0 0
    %1708 = vmatpush1.bf16.msra.mxu0 0
    %1709 = vmatprep.subr.bf16.mxu0 0
    %1710 = vmatpush1.bf16.msra.mxu0 0
    %1711 = vmatprep.subr.bf16.mxu0 0
    %1712 = vmatpush1.bf16.msra.mxu0 0
    %1713 = vmatprep.subr.bf16.mxu0 0
    %1714 = vmatpush1.bf16.msra.mxu0 0
    %1715 = vmatprep.subr.bf16.mxu0 0
    %1716 = vmatpush1.bf16.msra.mxu0 0
    %1717 = vmatprep.subr.bf16.mxu0 0
    %1718 = vmatpush1.bf16.msra.mxu0 0
    %1719 = vmatprep.subr.bf16.mxu0 0
    %1720 = vmatpush1.bf16.msra.mxu0 0
    %1721 = vmatprep.subr.bf16.mxu0 0
    %1722 = vmatpush1.bf16.msra.mxu0 0
    %1723 = vmatprep.subr.bf16.mxu0 0
    %1724 = vmatpush1.bf16.msra.mxu0 0
    %1725 = vmatprep.subr.bf16.mxu0 0
    %1726 = vmatpush1.bf16.msra.mxu0 0
    %1727 = vmatprep.subr.bf16.mxu0 0
    %1728 = vmatpush1.bf16.msra.mxu0 0
    %1729 = vmatprep.mubr.bf16.mxu0 0
    %1730 = vmatmul.mubr.bf16.gmra.mrb[0].mxu0 %v1639
    %v1731 = vpop.f32.mrb[0].mxu0
    %v1732 = vadd.f32 0.0, %v1731
    %v1733 = vpop.f32.mrb[0].mxu0
    %v1734 = vadd.f32 0.0, %v1733
    %v1735 = vpop.f32.mrb[0].mxu0
    %v1736 = vadd.f32 0.0, %v1735
    %v1737 = vpop.f32.mrb[0].mxu0
    %v1738 = vadd.f32 0.0, %v1737
    %1739 = vmatprep.mubr.bf16.mxu0 0
    %1740 = vmatmul.mubr.bf16.gmra.mrb[0].mxu0 %v1642
    %v1741 = vpop.f32.mrb[0].mxu0
    %v1742 = vadd.f32 0.0, %v1741
    %v1743 = vpop.f32.mrb[0].mxu0
    %v1744 = vadd.f32 0.0, %v1743
    %v1745 = vpop.f32.mrb[0].mxu0
    %v1746 = vadd.f32 0.0, %v1745
    %v1747 = vpop.f32.mrb[0].mxu0
    %v1748 = vadd.f32 0.0, %v1747
    %1749 = vdwg.mxu0
    %v1750 = vmul.f32 %v1310, %v1679
    %v1751 = vmul.f32 %v1311, %v1681
    %v1752 = vmul.f32 %v1312, %v1732
    %v1753 = vmul.f32 %v1313, %v1734
    %v1754 = vmul.f32 %v1314, %v1683
    %v1755 = vmul.f32 %v1315, %v1685
    %v1756 = vmul.f32 %v1316, %v1736
    %v1757 = vmul.f32 %v1317, %v1738
    %v1758 = vmul.f32 %v1318, %v1689
    %v1759 = vmul.f32 %v1319, %v1691
    %v1760 = vmul.f32 %v1320, %v1742
    %v1761 = vmul.f32 %v1321, %v1744
    %v1762 = vmul.f32 %v1322, %v1693
    %v1763 = vmul.f32 %v1323, %v1695
    %v1764 = vmul.f32 %v1324, %v1746
    %v1765 = vmul.f32 %v1325, %v1748
    %v1766 = vpack.c.bf16 %v1754, %v1750
    %v1767 = vpack.c.bf16 %v1755, %v1751
    %v1768 = vpack.c.bf16 %v1756, %v1752
    %v1769 = vpack.c.bf16 %v1757, %v1753
    %v1770 = vpack.c.bf16 %v1762, %v1758
    %v1771 = vpack.c.bf16 %v1763, %v1759
    %v1772 = vpack.c.bf16 %v1764, %v1760
    %v1773 = vpack.c.bf16 %v1765, %v1761
    %v1782 = vunpack.c.l.b16 %v1766
    %v1783 = vunpack.c.l.b16 %v1767
    %v1784 = vunpack.c.l.b16 %v1768
    %v1785 = vunpack.c.l.b16 %v1769
    %v1786 = vunpack.c.h.b16 %v1766
    %v1787 = vunpack.c.h.b16 %v1767
    %v1788 = vunpack.c.h.b16 %v1768
    %v1789 = vunpack.c.h.b16 %v1769
    %v1790 = vunpack.c.l.b16 %v1770
    %v1791 = vunpack.c.l.b16 %v1771
    %v1792 = vunpack.c.l.b16 %v1772
    %v1793 = vunpack.c.l.b16 %v1773
    %v1794 = vunpack.c.h.b16 %v1770
    %v1795 = vunpack.c.h.b16 %v1771
    %v1796 = vunpack.c.h.b16 %v1772
    %v1797 = vunpack.c.h.b16 %v1773
    %v1798 = vpack.c.b16 %v1783, %v1782
    %v1799 = vpack.c.b16 %v1785, %v1784
    %v1800 = vpack.c.b16 %v1787, %v1786
    %v1801 = vpack.c.b16 %v1789, %v1788
    %v1802 = vpack.c.b16 %v1791, %v1790
    %v1803 = vpack.c.b16 %v1793, %v1792
    %v1804 = vpack.c.b16 %v1795, %v1794
    %v1805 = vpack.c.b16 %v1797, %v1796
    %1814 = vst [vmem:[#allocation2] sm:$0xff] %v1798
    %1815 = vst [vmem:[#allocation2 + $0x8] sm:$0xff] %v1799
    %1816 = vst [vmem:[#allocation2 + $0x10] sm:$0xff] %v1800
    %1817 = vst [vmem:[#allocation2 + $0x18] sm:$0xff] %v1801
    %1818 = vst [vmem:[#allocation2 + $0x20] sm:$0xff] %v1802
    %1819 = vst [vmem:[#allocation2 + $0x28] sm:$0xff] %v1803
    %1820 = vst [vmem:[#allocation2 + $0x30] sm:$0xff] %v1804
    %1821 = vst [vmem:[#allocation2 + $0x38] sm:$0xff] %v1805
    // Predicated region
    $region54: #{tpu_custom_call.1} parent=1 // pred_check
      _
    $region55: #{tpu_custom_call.1} parent=1 // pred_check_branch
      %1823 = sbr.rel (0) target = $region57
    $region56: #{tpu_custom_call.1} parent=1 // pred_region
      %s1825 = ssub.s32 1024, 1024
      %1826 = vsyncadd [#allocation3], %s1825
      %s1827 = sshll.u32 [#allocation2], 4
      %s1828 = int_to_ptr.vmem [resolvable:$true] %s1827
      %1833 = dma.vmem_to_hbm [thread:$0]  %s1828, 1024, %s13, [#allocation3], 256, 256, 16
    $region57: #{tpu_custom_call.1} parent=1 // pred_fallthru
      _
    // Predicated region
    $region58: #{tpu_custom_call.1} parent=1 // pred_check
      _
    $region59: #{tpu_custom_call.1} parent=1 // pred_check_branch
      %1835 = sbr.rel (0) target = $region61
    $region60: #{tpu_custom_call.1} parent=1 // pred_region
      %1836 = dma.done [#allocation3], 1024
    $region61: #{tpu_custom_call.1} parent=1 // pred_fallthru
      _
    %1837 = vsyncpa [#allocation3], 1

</llo_original>
